<compile_context>
chip_gen: v7x
topology: tpu7x:2x2x1
jax: 0.10.0
libtpu: 0.0.40
codegen_flags: <defaults>
</compile_context>

<pallas_src>
import functools

import jax
import jax.numpy as jnp
from jax import lax
from jax.experimental import pallas as pl
from jax.experimental.pallas import tpu as pltpu

NEG_SLOPE = 0.01   # torch.nn.functional.leaky_relu default
HIDDEN = 750
HIDDEN_PAD = 768   # 750 rounded up to a multiple of 128


def _leaky_relu(v):
    # slope < 1  =>  max(v, slope*v) == leaky_relu(v); lowers to vmul+vmax.
    return jnp.maximum(v, NEG_SLOPE * v)


def mlp_kernel(x_ref, w1_ref, b1_ref, w2_ref, b2_ref, w3_ref, b3_ref, o_ref):
    # Layer 1: (TILE_B, D) @ (D, 768) on the MXU, f32 accumulation.
    # x is cast to the weight dtype (bf16 on the fast path, f32 on the exact path).
    x = x_ref[...].astype(w1_ref.dtype)
    h = jnp.dot(x, w1_ref[...], preferred_element_type=jnp.float32)
    h = _leaky_relu(h + b1_ref[...])

    # Layer 2: (TILE_B, 768) @ (768, 768) on the MXU (dominant cost), f32 acc.
    h = jnp.dot(h.astype(w2_ref.dtype), w2_ref[...],
                preferred_element_type=jnp.float32)
    h = _leaky_relu(h + b2_ref[...])

    # Layer 3: N=1 output -> f32 VPU multiply + XLU lane reduction (no MXU).
    h = jnp.sum(h * w3_ref[...], axis=-1, keepdims=True) + b3_ref[...]
    o_ref[...] = _leaky_relu(h).astype(o_ref.dtype)


def _pad_params(params, matmul_dtype):
    """Zero-pad hidden dim 750 -> 768 (padded channels stay identically zero
    through both LeakyReLUs) and cast the two big matmul weights to the MXU
    dtype.  Biases and w3 stay f32 (VPU epilogue)."""
    w1, b1 = params["w1"], params["b1"]
    w2, b2 = params["w2"], params["b2"]
    w3, b3 = params["w3"], params["b3"]
    ph = HIDDEN_PAD - w1.shape[1]
    if ph > 0:
        w1 = jnp.pad(w1, ((0, 0), (0, ph)))
        b1 = jnp.pad(b1, ((0, 0), (0, ph)))
        w2 = jnp.pad(w2, ((0, ph), (0, ph)))
        b2 = jnp.pad(b2, ((0, 0), (0, ph)))
        w3 = jnp.pad(w3, ((0, ph), (0, 0)))
    w1 = w1.astype(matmul_dtype)
    w2 = w2.astype(matmul_dtype)
    w3_row = w3.reshape(1, -1)  # (1, 768) f32 row for the VPU/XLU final layer
    return w1, b1, w2, b2, w3_row, b3


def _pick_batch_tile(B, tile_b, min_tiles):
    """Balanced batch tile: >= min_tiles grid steps when B allows (v7x has 2
    TensorCores), each tile ~B/num_tiles rounded up to 8 sublanes, so padded
    rows never dominate a whole tile."""
    num_tiles = max(1, -(-B // tile_b))
    if min_tiles > 1 and B >= 8 * min_tiles:
        num_tiles = max(num_tiles, min_tiles)
    tile = -(-B // num_tiles)
    tile = ((tile + 7) // 8) * 8
    return tile, num_tiles


def simple_network_forward(x, params, *, tile_b=2048, min_tiles=2,
                           matmul_dtype=jnp.bfloat16):
    """x: (B, input_size) float32; params: dict of w1,b1,w2,b2,w3,b3 (750-dim).

    matmul_dtype=jnp.bfloat16 (default) runs the two big dots natively on the
    bf16 MXU with f32 accumulation; pass jnp.float32 for the exact PyTorch-f32
    forward. Output is always f32."""
    B, D = x.shape
    w1, b1, w2, b2, w3_row, b3 = _pad_params(params, matmul_dtype)
    H = w1.shape[1]

    TILE_B, num_tiles = _pick_batch_tile(B, tile_b, min_tiles)
    B_pad = TILE_B * num_tiles
    if B_pad != B:
        x = jnp.pad(x, ((0, B_pad - B), (0, 0)))

    const = lambda i: (0, 0)  # weights/biases resident across all grid steps

    operands = (x, w1, b1, w2, b2, w3_row, b3)
    flops = 2 * B_pad * (D * H + H * H + H)
    bytes_accessed = (sum(int(a.size) * a.dtype.itemsize for a in operands)
                      + B_pad * 4)

    out = pl.pallas_call(
        mlp_kernel,
        out_shape=jax.ShapeDtypeStruct((B_pad, 1), jnp.float32),
        grid=(num_tiles,),
        in_specs=[
            pl.BlockSpec((TILE_B, D), lambda i: (i, 0)),   # x tile (pipelined)
            pl.BlockSpec((D, H), const),                   # w1 (resident)
            pl.BlockSpec((1, H), const),                   # b1
            pl.BlockSpec((H, H), const),                   # w2 (resident)
            pl.BlockSpec((1, H), const),                   # b2
            pl.BlockSpec((1, H), const),                   # w3 (row, f32)
            pl.BlockSpec((1, 1), const),                   # b3
        ],
        out_specs=pl.BlockSpec((TILE_B, 1), lambda i: (i, 0)),
        compiler_params=pltpu.CompilerParams(
            dimension_semantics=("parallel",),   # shard batch tiles on v7x's 2 TCs
        ),
        cost_estimate=pl.CostEstimate(
            flops=int(flops),
            transcendentals=0,
            bytes_accessed=int(bytes_accessed),
        ),
    )(*operands)

    return out[:B]


def init_params(key, input_size, hidden=HIDDEN):
    """Deterministic init mirroring the PyTorch module:
    weights ~ xavier_uniform_, biases ~ U(-1/sqrt(fan_in), 1/sqrt(fan_in))."""
    ks = jax.random.split(key, 6)

    def xavier(k, fan_in, fan_out):
        bound = jnp.sqrt(6.0 / (fan_in + fan_out))
        # stored as (in, out) -> transpose of torch's (out, in)
        return jax.random.uniform(k, (fan_in, fan_out), jnp.float32, -bound, bound)

    def bias(k, fan_in, fan_out):
        bound = 1.0 / jnp.sqrt(fan_in)
        return jax.random.uniform(k, (1, fan_out), jnp.float32, -bound, bound)

    return {
        "w1": xavier(ks[0], input_size, hidden),
        "b1": bias(ks[1], input_size, hidden),
        "w2": xavier(ks[2], hidden, hidden),
        "b2": bias(ks[3], hidden, hidden),
        "w3": xavier(ks[4], hidden, 1),
        "b3": bias(ks[5], hidden, 1),
    }


def reference_forward(x, p):
    # HIGHEST precision so the pure-JAX reference is genuinely f32 on TPU
    # (avoids the default-bf16-matmul reference pitfall).
    dot = functools.partial(jnp.dot, precision=lax.Precision.HIGHEST)
    h = _leaky_relu(dot(x, p["w1"]) + p["b1"])
    h = _leaky_relu(dot(h, p["w2"]) + p["b2"])
    h = _leaky_relu(dot(h, p["w3"]) + p["b3"])
    return h


if __name__ == "__main__":
    key = jax.random.PRNGKey(0)
    k_x, k_p = jax.random.split(key)

    # NOTE: at B=8 the kernel is pure launch/DMA overhead; the bf16 MXU path,
    # the larger batch tile and the >=2-tile grid pay off at realistic batches.
    batch, input_size = 8, 32
    x = jax.random.normal(k_x, (batch, input_size), jnp.float32)
    params = init_params(k_p, input_size)

    ref = reference_forward(x, params)

    # Default fast path: bf16 MXU inputs, f32 accumulation (tolerance-tested).
    out_bf16 = jax.block_until_ready(simple_network_forward(x, params))
    assert out_bf16.shape == (batch, 1), out_bf16.shape
    assert jnp.allclose(out_bf16, ref, atol=2e-2, rtol=2e-2), \
        "bf16-path mismatch vs f32 JAX reference"

    # Exact path: f32 matmul inputs, matches the PyTorch f32 forward.
    out_f32 = jax.block_until_ready(
        simple_network_forward(x, params, matmul_dtype=jnp.float32))
    assert out_f32.shape == (batch, 1), out_f32.shape
    assert jnp.allclose(out_f32, ref, atol=1e-4, rtol=1e-3), \
        "f32-path mismatch vs f32 JAX reference"

    print("KERNEL_OK")
</pallas_src>

<mosaic_0001>
module attributes {stable_mosaic.version = 11 : i64} {
  func.func @mlp_kernel(%arg0: i32, %arg1: memref<8x32xf32, #tpu.memory_space<vmem>>, %arg2: memref<32x768xbf16, #tpu.memory_space<vmem>>, %arg3: memref<1x768xf32, #tpu.memory_space<vmem>>, %arg4: memref<768x768xbf16, #tpu.memory_space<vmem>>, %arg5: memref<1x768xf32, #tpu.memory_space<vmem>>, %arg6: memref<1x768xf32, #tpu.memory_space<vmem>>, %arg7: memref<1x1xf32, #tpu.memory_space<vmem>>, %arg8: memref<8x1xf32, #tpu.memory_space<vmem>>) attributes {dimension_semantics = [#tpu.dimension_semantics<parallel>], iteration_bounds = array<i64: 1>, scalar_prefetch = 0 : i64, scratch_operands = 0 : i64, tpu.core_type = #tpu.core_type<tc>, window_params = [{transform_indices = @transform_0, window_bounds = array<i64: 8, 32>}, {pipeline_mode = #tpu.pipeline_mode<synchronous>, transform_indices = @transform_1, window_bounds = array<i64: 32, 768>}, {pipeline_mode = #tpu.pipeline_mode<synchronous>, transform_indices = @transform_2, window_bounds = array<i64: 1, 768>}, {pipeline_mode = #tpu.pipeline_mode<synchronous>, transform_indices = @transform_3, window_bounds = array<i64: 768, 768>}, {pipeline_mode = #tpu.pipeline_mode<synchronous>, transform_indices = @transform_4, window_bounds = array<i64: 1, 768>}, {pipeline_mode = #tpu.pipeline_mode<synchronous>, transform_indices = @transform_5, window_bounds = array<i64: 1, 768>}, {pipeline_mode = #tpu.pipeline_mode<synchronous>, transform_indices = @transform_6, window_bounds = array<i64: 1, 1>}, {transform_indices = @transform_7, window_bounds = array<i64: 8, 1>}]} {
    %c0 = arith.constant 0 : index
    %c0_0 = arith.constant 0 : index
    %0 = vector.load %arg1[%c0, %c0_0] : memref<8x32xf32, #tpu.memory_space<vmem>>, vector<8x32xf32>
    %1 = arith.truncf %0 : vector<8x32xf32> to vector<8x32xbf16>
    %c0_1 = arith.constant 0 : index
    %c0_2 = arith.constant 0 : index
    %2 = vector.load %arg2[%c0_1, %c0_2] : memref<32x768xbf16, #tpu.memory_space<vmem>>, vector<32x768xbf16>
    %cst = arith.constant dense<0.000000e+00> : vector<8x768xf32>
    %3 = tpu.matmul %1, %2, %cst {dimension_numbers = #tpu.dot_dimension_numbers<[1], [0], [0], [1], [0, 0, 1, 1], [], []>} : vector<8x32xbf16>, vector<32x768xbf16>, vector<8x768xf32> -> vector<8x768xf32>
    %c0_3 = arith.constant 0 : index
    %c0_4 = arith.constant 0 : index
    %4 = vector.load %arg3[%c0_3, %c0_4] : memref<1x768xf32, #tpu.memory_space<vmem>>, vector<1x768xf32>
    %5 = vector.broadcast %4 : vector<1x768xf32> to vector<8x768xf32>
    %6 = arith.addf %3, %5 : vector<8x768xf32>
    %cst_5 = arith.constant 0.00999999977 : f32
    %7 = vector.broadcast %cst_5 : f32 to vector<8x768xf32>
    %8 = arith.mulf %7, %6 : vector<8x768xf32>
    %9 = arith.maximumf %6, %8 : vector<8x768xf32>
    %10 = arith.truncf %9 : vector<8x768xf32> to vector<8x768xbf16>
    %c0_6 = arith.constant 0 : index
    %c0_7 = arith.constant 0 : index
    %11 = vector.load %arg4[%c0_6, %c0_7] : memref<768x768xbf16, #tpu.memory_space<vmem>>, vector<768x768xbf16>
    %cst_8 = arith.constant dense<0.000000e+00> : vector<8x768xf32>
    %12 = tpu.matmul %10, %11, %cst_8 {dimension_numbers = #tpu.dot_dimension_numbers<[1], [0], [0], [1], [0, 0, 1, 1], [], []>} : vector<8x768xbf16>, vector<768x768xbf16>, vector<8x768xf32> -> vector<8x768xf32>
    %c0_9 = arith.constant 0 : index
    %c0_10 = arith.constant 0 : index
    %13 = vector.load %arg5[%c0_9, %c0_10] : memref<1x768xf32, #tpu.memory_space<vmem>>, vector<1x768xf32>
    %14 = vector.broadcast %13 : vector<1x768xf32> to vector<8x768xf32>
    %15 = arith.addf %12, %14 : vector<8x768xf32>
    %cst_11 = arith.constant 0.00999999977 : f32
    %16 = vector.broadcast %cst_11 : f32 to vector<8x768xf32>
    %17 = arith.mulf %16, %15 : vector<8x768xf32>
    %18 = arith.maximumf %15, %17 : vector<8x768xf32>
    %c0_12 = arith.constant 0 : index
    %c0_13 = arith.constant 0 : index
    %19 = vector.load %arg6[%c0_12, %c0_13] : memref<1x768xf32, #tpu.memory_space<vmem>>, vector<1x768xf32>
    %20 = vector.broadcast %19 : vector<1x768xf32> to vector<8x768xf32>
    %21 = arith.mulf %18, %20 : vector<8x768xf32>
    %cst_14 = arith.constant dense<0.000000e+00> : vector<8xf32>
    %22 = vector.multi_reduction <add>, %21, %cst_14 [1] : vector<8x768xf32> to vector<8xf32>
    %23 = vector.shape_cast %22 : vector<8xf32> to vector<8x1xf32>
    %c0_15 = arith.constant 0 : index
    %c0_16 = arith.constant 0 : index
    %24 = vector.load %arg7[%c0_15, %c0_16] : memref<1x1xf32, #tpu.memory_space<vmem>>, vector<1x1xf32>
    %25 = vector.broadcast %24 : vector<1x1xf32> to vector<8x1xf32>
    %26 = arith.addf %23, %25 : vector<8x1xf32>
    %cst_17 = arith.constant 0.00999999977 : f32
    %27 = vector.broadcast %cst_17 : f32 to vector<8x1xf32>
    %28 = arith.mulf %27, %26 : vector<8x1xf32>
    %29 = arith.maximumf %26, %28 : vector<8x1xf32>
    %c0_18 = arith.constant 0 : index
    %c0_19 = arith.constant 0 : index
    %30 = vector.load %arg8[%c0_18, %c0_19] : memref<8x1xf32, #tpu.memory_space<vmem>>, vector<8x1xf32>
    tpu.vector_store %arg8[%c0_18, %c0_19], %29 {strides = array<i32>} : memref<8x1xf32, #tpu.memory_space<vmem>>, vector<8x1xf32>,
    return
  }
  func.func @transform_0(%arg0: i32) -> (i32, i32) {
    %c0_i32 = arith.constant 0 : i32
    %c0_i32_0 = arith.constant 0 : i32
    return %arg0, %c0_i32 : i32, i32
  }
  func.func @transform_1(%arg0: i32) -> (i32, i32) {
    %c0_i32 = arith.constant 0 : i32
    %c0_i32_0 = arith.constant 0 : i32
    %c0_i32_1 = arith.constant 0 : i32
    return %c0_i32, %c0_i32_0 : i32, i32
  }
  func.func @transform_2(%arg0: i32) -> (i32, i32) {
    %c0_i32 = arith.constant 0 : i32
    %c0_i32_0 = arith.constant 0 : i32
    %c0_i32_1 = arith.constant 0 : i32
    return %c0_i32, %c0_i32_0 : i32, i32
  }
  func.func @transform_3(%arg0: i32) -> (i32, i32) {
    %c0_i32 = arith.constant 0 : i32
    %c0_i32_0 = arith.constant 0 : i32
    %c0_i32_1 = arith.constant 0 : i32
    return %c0_i32, %c0_i32_0 : i32, i32
  }
  func.func @transform_4(%arg0: i32) -> (i32, i32) {
    %c0_i32 = arith.constant 0 : i32
    %c0_i32_0 = arith.constant 0 : i32
    %c0_i32_1 = arith.constant 0 : i32
    return %c0_i32, %c0_i32_0 : i32, i32
  }
  func.func @transform_5(%arg0: i32) -> (i32, i32) {
    %c0_i32 = arith.constant 0 : i32
    %c0_i32_0 = arith.constant 0 : i32
    %c0_i32_1 = arith.constant 0 : i32
    return %c0_i32, %c0_i32_0 : i32, i32
  }
  func.func @transform_6(%arg0: i32) -> (i32, i32) {
    %c0_i32 = arith.constant 0 : i32
    %c0_i32_0 = arith.constant 0 : i32
    %c0_i32_1 = arith.constant 0 : i32
    return %c0_i32, %c0_i32_0 : i32, i32
  }
  func.func @transform_7(%arg0: i32) -> (i32, i32) {
    %c0_i32 = arith.constant 0 : i32
    %c0_i32_0 = arith.constant 0 : i32
    return %arg0, %c0_i32 : i32, i32
  }
}

</mosaic_0001>

<llo_original>
// kernel: tpu_custom_call.1
$region0: #{tpu_custom_call.1}
  #allocation0 [shape = 'u32[]', space=smem, size = 0x4, offset = 0x4, fixed_abs, tag = 'smem constant byte address 0x4 - core index']
  #allocation1 [shape = 'u32[144,128]{1,0:T(1,128)}', space=vmem, size = 0x12000, scoped, tag = 'internal scratch']
  #allocation2 [shape = 'f32[1,1]{1,0:T(1,128)S(1)}', space=vmem, size = 0x200, scoped, tag = 'scoped memory for tpu_custom_call.1']
  %s0 = inlined_call_operand.hbm [shape: f32[8,32], index: 0, kind: input, shape index: {}]
  %s1 = inlined_call_operand.hbm [shape: bf16[32,768], index: 1, kind: input, shape index: {}]
  %s2 = inlined_call_operand.hbm [shape: f32[1,768], index: 2, kind: input, shape index: {}]
  %s3 = inlined_call_operand.hbm [shape: bf16[768,768], index: 3, kind: input, shape index: {}]
  %s4 = inlined_call_operand.hbm [shape: f32[1,768], index: 4, kind: input, shape index: {}]
  %s5 = inlined_call_operand.hbm [shape: f32[1,768], index: 5, kind: input, shape index: {}]
  %s6 = inlined_call_operand.<no memory space> [shape: f32[1,1], index: 6, kind: input, shape index: {}]
  %s7 = inlined_call_operand.vmem [shape: f32[8,1], index: 7, kind: output, shape index: {}]
  %s8 = sld [smem:[#allocation0]]
  $region62: #{tpu_custom_call.1} parent=0
    _
  %s10 = ssub.s32 1, %s8
  %s11 = scalar_select 0, %s10, %s8
  %v12 = vstv %s6
  %13 = vst [vmem:[#allocation2] sm:$0x1] %v12
  $region1: #{tpu_custom_call.1} parent=0
    #allocation3 [shape = 'u8[4096]{0}', space=vmem, size = 0x1000, scoped, tag = 'input window, operand 0, single buffered']
    #allocation4 [shape = 's32[1]{0}', space=sflag, size = 0x4, scoped, tag = 'scoped memory for tpu_custom_call.1']
    #allocation5 [shape = 'u8[49152]{0}', space=vmem, size = 0xc000, scoped, tag = 'input window, operand 1, single buffered']
    #allocation6 [shape = 's32[1]{0}', space=sflag, size = 0x4, scoped, tag = 'scoped memory for tpu_custom_call.1']
    #allocation7 [shape = 'u8[3072]{0}', space=vmem, size = 0xc00, scoped, tag = 'input window, operand 2, single buffered']
    #allocation8 [shape = 'u8[1179648]{0}', space=vmem, size = 0x120000, scoped, tag = 'input window, operand 3, single buffered']
    #allocation9 [shape = 's32[1]{0}', space=sflag, size = 0x4, scoped, tag = 'scoped memory for tpu_custom_call.1']
    #allocation10 [shape = 'u8[3072]{0}', space=vmem, size = 0xc00, scoped, tag = 'input window, operand 4, single buffered']
    #allocation11 [shape = 'u8[3072]{0}', space=vmem, size = 0xc00, scoped, tag = 'input window, operand 5, single buffered']
    #allocation12 [shape = 's32[1]{0}', space=sflag, size = 0x4, scoped, tag = 'scoped memory for tpu_custom_call.1']
    %14 = vsyncpa [#allocation4], 0
    %15 = vsyncpa [#allocation6], 0
    %16 = vsyncpa [#allocation9], 0
    %17 = vsyncpa [#allocation12], 0
    // Predicated region
    $region2: #{tpu_custom_call.1} parent=1 // pred_check
      _
    $region3: #{tpu_custom_call.1} parent=1 // pred_check_branch
      %19 = sbr.rel (0) target = $region5
    $region4: #{tpu_custom_call.1} parent=1 // pred_region
      %s21 = ssub.s32 128, 128
      %22 = vsyncadd [#allocation4], %s21
      %s24 = sshll.u32 [#allocation3], 4
      %s25 = int_to_ptr.vmem [resolvable:$true] %s24
      %27 = dma.hbm_to_vmem [thread:$0]  %s0, 128, %s25, [#allocation4]
    $region5: #{tpu_custom_call.1} parent=1 // pred_fallthru
      _
    // Predicated region
    $region6: #{tpu_custom_call.1} parent=1 // pred_check
      _
    $region7: #{tpu_custom_call.1} parent=1 // pred_check_branch
      %29 = sbr.rel (0) target = $region9
    $region8: #{tpu_custom_call.1} parent=1 // pred_region
      %s31 = ssub.s32 1536, 1536
      %32 = vsyncadd [#allocation6], %s31
      %s33 = sshll.u32 [#allocation5], 4
      %s34 = int_to_ptr.vmem [resolvable:$true] %s33
      %39 = dma.hbm_to_vmem [thread:$0]  %s1, 1536, %s34, [#allocation6], 384, 384, 24
    $region9: #{tpu_custom_call.1} parent=1 // pred_fallthru
      _
    // Predicated region
    $region10: #{tpu_custom_call.1} parent=1 // pred_check
      _
    $region11: #{tpu_custom_call.1} parent=1 // pred_check_branch
      %41 = sbr.rel (0) target = $region13
    $region12: #{tpu_custom_call.1} parent=1 // pred_region
      %s43 = ssub.s32 96, 96
      %44 = vsyncadd [#allocation6], %s43
      %s46 = sshll.u32 [#allocation7], 4
      %s47 = int_to_ptr.vmem [resolvable:$true] %s46
      %49 = dma.hbm_to_vmem [thread:$0]  %s2, 96, %s47, [#allocation6]
    $region13: #{tpu_custom_call.1} parent=1 // pred_fallthru
      _
    // Predicated region
    $region14: #{tpu_custom_call.1} parent=1 // pred_check
      _
    $region15: #{tpu_custom_call.1} parent=1 // pred_check_branch
      %51 = sbr.rel (0) target = $region17
    $region16: #{tpu_custom_call.1} parent=1 // pred_region
      %s53 = ssub.s32 36864, 36864
      %54 = vsyncadd [#allocation9], %s53
      %s55 = sshll.u32 [#allocation8], 4
      %s56 = int_to_ptr.vmem [resolvable:$true] %s55
      %61 = dma.hbm_to_vmem [thread:$0]  %s3, 36864, %s56, [#allocation9], 384, 384, 24
    $region17: #{tpu_custom_call.1} parent=1 // pred_fallthru
      _
    // Predicated region
    $region18: #{tpu_custom_call.1} parent=1 // pred_check
      _
    $region19: #{tpu_custom_call.1} parent=1 // pred_check_branch
      %63 = sbr.rel (0) target = $region21
    $region20: #{tpu_custom_call.1} parent=1 // pred_region
      %s65 = ssub.s32 96, 96
      %66 = vsyncadd [#allocation9], %s65
      %s68 = sshll.u32 [#allocation10], 4
      %s69 = int_to_ptr.vmem [resolvable:$true] %s68
      %71 = dma.hbm_to_vmem [thread:$0]  %s4, 96, %s69, [#allocation9]
    $region21: #{tpu_custom_call.1} parent=1 // pred_fallthru
      _
    // Predicated region
    $region22: #{tpu_custom_call.1} parent=1 // pred_check
      _
    $region23: #{tpu_custom_call.1} parent=1 // pred_check_branch
      %73 = sbr.rel (0) target = $region25
    $region24: #{tpu_custom_call.1} parent=1 // pred_region
      %s75 = ssub.s32 96, 96
      %76 = vsyncadd [#allocation12], %s75
      %s78 = sshll.u32 [#allocation11], 4
      %s79 = int_to_ptr.vmem [resolvable:$true] %s78
      %81 = dma.hbm_to_vmem [thread:$0]  %s5, 96, %s79, [#allocation12]
    $region25: #{tpu_custom_call.1} parent=1 // pred_fallthru
      _
    // Predicated region
    $region26: #{tpu_custom_call.1} parent=1 // pred_check
      _
    $region27: #{tpu_custom_call.1} parent=1 // pred_check_branch
      %83 = sbr.rel (0) target = $region29
    $region28: #{tpu_custom_call.1} parent=1 // pred_region
      _
    $region29: #{tpu_custom_call.1} parent=1 // pred_fallthru
      _
    // Predicated region
    $region30: #{tpu_custom_call.1} parent=1 // pred_check
      _
    $region31: #{tpu_custom_call.1} parent=1 // pred_check_branch
      %85 = sbr.rel (0) target = $region33
    $region32: #{tpu_custom_call.1} parent=1 // pred_region
      %86 = dma.done [#allocation4], 128
    $region33: #{tpu_custom_call.1} parent=1 // pred_fallthru
      _
    // Predicated region
    $region34: #{tpu_custom_call.1} parent=1 // pred_check
      _
    $region35: #{tpu_custom_call.1} parent=1 // pred_check_branch
      %88 = sbr.rel (0) target = $region37
    $region36: #{tpu_custom_call.1} parent=1 // pred_region
      %89 = dma.done [#allocation6], 1536
    $region37: #{tpu_custom_call.1} parent=1 // pred_fallthru
      _
    // Predicated region
    $region38: #{tpu_custom_call.1} parent=1 // pred_check
      _
    $region39: #{tpu_custom_call.1} parent=1 // pred_check_branch
      %91 = sbr.rel (0) target = $region41
    $region40: #{tpu_custom_call.1} parent=1 // pred_region
      %92 = dma.done [#allocation6], 96
    $region41: #{tpu_custom_call.1} parent=1 // pred_fallthru
      _
    // Predicated region
    $region42: #{tpu_custom_call.1} parent=1 // pred_check
      _
    $region43: #{tpu_custom_call.1} parent=1 // pred_check_branch
      %94 = sbr.rel (0) target = $region45
    $region44: #{tpu_custom_call.1} parent=1 // pred_region
      %95 = dma.done [#allocation9], 36864
    $region45: #{tpu_custom_call.1} parent=1 // pred_fallthru
      _
    // Predicated region
    $region46: #{tpu_custom_call.1} parent=1 // pred_check
      _
    $region47: #{tpu_custom_call.1} parent=1 // pred_check_branch
      %97 = sbr.rel (0) target = $region49
    $region48: #{tpu_custom_call.1} parent=1 // pred_region
      %98 = dma.done [#allocation9], 96
    $region49: #{tpu_custom_call.1} parent=1 // pred_fallthru
      _
    // Predicated region
    $region50: #{tpu_custom_call.1} parent=1 // pred_check
      _
    $region51: #{tpu_custom_call.1} parent=1 // pred_check_branch
      %100 = sbr.rel (0) target = $region53
    $region52: #{tpu_custom_call.1} parent=1 // pred_region
      %101 = dma.done [#allocation12], 96
    $region53: #{tpu_custom_call.1} parent=1 // pred_fallthru
      _
    %v103 = vld [vmem:[#allocation3] sm:$0xff]
    %v104 = vpack.c.bf16 %v103, %v103
    %v105 = vld [vmem:[#allocation5] sm:$0xff]
    %v106 = vld [vmem:[#allocation5 + $0x8] sm:$0xff]
    %v107 = vld [vmem:[#allocation5 + $0x10] sm:$0xff]
    %v108 = vld [vmem:[#allocation5 + $0x18] sm:$0xff]
    %v109 = vld [vmem:[#allocation5 + $0x20] sm:$0xff]
    %v110 = vld [vmem:[#allocation5 + $0x28] sm:$0xff]
    %v111 = vld [vmem:[#allocation5 + $0x30] sm:$0xff]
    %v112 = vld [vmem:[#allocation5 + $0x38] sm:$0xff]
    %v113 = vld [vmem:[#allocation5 + $0x40] sm:$0xff]
    %v114 = vld [vmem:[#allocation5 + $0x48] sm:$0xff]
    %v115 = vld [vmem:[#allocation5 + $0x50] sm:$0xff]
    %v116 = vld [vmem:[#allocation5 + $0x58] sm:$0xff]
    %v117 = vld [vmem:[#allocation7] sm:$0x3f]
    %v119 = vlaneseq
    %v120 = vshrl.u32 %v119, 7
    %v121 = vsub.s32 0, %v120
    %v122 = vrot.slane %v117, %v121
    %v123 = vlaneseq
    %v124 = vshrl.u32 %v123, 7
    %v125 = vsub.s32 1, %v124
    %v126 = vrot.slane %v117, %v125
    %v127 = vlaneseq
    %v128 = vshrl.u32 %v127, 7
    %v129 = vsub.s32 2, %v128
    %v130 = vrot.slane %v117, %v129
    %v131 = vlaneseq
    %v132 = vshrl.u32 %v131, 7
    %v133 = vsub.s32 3, %v132
    %v134 = vrot.slane %v117, %v133
    %v135 = vlaneseq
    %v136 = vshrl.u32 %v135, 7
    %v137 = vsub.s32 4, %v136
    %v138 = vrot.slane %v117, %v137
    %v139 = vlaneseq
    %v140 = vshrl.u32 %v139, 7
    %v141 = vsub.s32 5, %v140
    %v142 = vrot.slane %v117, %v141
    %v161 = vunpack.c.l.b16 %v105
    %v162 = vunpack.c.h.b16 %v105
    %v163 = vunpack.c.l.b16 %v106
    %v164 = vunpack.c.h.b16 %v106
    %v165 = vunpack.c.l.b16 %v107
    %v166 = vunpack.c.h.b16 %v107
    %v167 = vunpack.c.l.b16 %v108
    %v168 = vunpack.c.h.b16 %v108
    %v169 = vunpack.c.l.b16 %v109
    %v170 = vunpack.c.h.b16 %v109
    %v171 = vunpack.c.l.b16 %v110
    %v172 = vunpack.c.h.b16 %v110
    %v173 = vunpack.c.l.b16 %v111
    %v174 = vunpack.c.h.b16 %v111
    %v175 = vunpack.c.l.b16 %v112
    %v176 = vunpack.c.h.b16 %v112
    %v177 = vunpack.c.l.b16 %v113
    %v178 = vunpack.c.h.b16 %v113
    %v179 = vunpack.c.l.b16 %v114
    %v180 = vunpack.c.h.b16 %v114
    %v181 = vunpack.c.l.b16 %v115
    %v182 = vunpack.c.h.b16 %v115
    %v183 = vunpack.c.l.b16 %v116
    %v184 = vunpack.c.h.b16 %v116
    %v185 = vpack.c.b16 %v167, %v161
    %v186 = vpack.c.b16 %v168, %v162
    %v187 = vpack.c.b16 %v169, %v163
    %v188 = vpack.c.b16 %v170, %v164
    %v189 = vpack.c.b16 %v171, %v165
    %v190 = vpack.c.b16 %v172, %v166
    %v191 = vpack.c.b16 %v179, %v173
    %v192 = vpack.c.b16 %v180, %v174
    %v193 = vpack.c.b16 %v181, %v175
    %v194 = vpack.c.b16 %v182, %v176
    %v195 = vpack.c.b16 %v183, %v177
    %v196 = vpack.c.b16 %v184, %v178
    %vm209 = vcmask 261120
    %v211 = vsel %vm209, %v104, 0
    %213 = vmatprep.subr.bf16.mxu0 %v186
    %214 = vmatpush1.bf16.msra.mxu0 %v185
    %215 = vmatprep.subr.bf16.mxu0 %v192
    %216 = vmatpush1.bf16.msra.mxu0 %v191
    %217 = vmatprep.subr.bf16.mxu0 0
    %218 = vmatpush1.bf16.msra.mxu0 0
    %219 = vmatprep.subr.bf16.mxu0 0
    %220 = vmatpush1.bf16.msra.mxu0 0
    %221 = vmatprep.subr.bf16.mxu0 0
    %222 = vmatpush1.bf16.msra.mxu0 0
    %223 = vmatprep.subr.bf16.mxu0 0
    %224 = vmatpush1.bf16.msra.mxu0 0
    %225 = vmatprep.subr.bf16.mxu0 0
    %226 = vmatpush1.bf16.msra.mxu0 0
    %227 = vmatprep.subr.bf16.mxu0 0
    %228 = vmatpush1.bf16.msra.mxu0 0
    %229 = vmatprep.subr.bf16.mxu0 0
    %230 = vmatpush1.bf16.msra.mxu0 0
    %231 = vmatprep.subr.bf16.mxu0 0
    %232 = vmatpush1.bf16.msra.mxu0 0
    %233 = vmatprep.subr.bf16.mxu0 0
    %234 = vmatpush1.bf16.msra.mxu0 0
    %235 = vmatprep.subr.bf16.mxu0 0
    %236 = vmatpush1.bf16.msra.mxu0 0
    %237 = vmatprep.subr.bf16.mxu0 0
    %238 = vmatpush1.bf16.msra.mxu0 0
    %239 = vmatprep.subr.bf16.mxu0 0
    %240 = vmatpush1.bf16.msra.mxu0 0
    %241 = vmatprep.subr.bf16.mxu0 0
    %242 = vmatpush1.bf16.msra.mxu0 0
    %243 = vmatprep.subr.bf16.mxu0 0
    %244 = vmatpush1.bf16.msra.mxu0 0
    %245 = vmatprep.mubr.bf16.mxu0 0
    %246 = vmatmul.mubr.bf16.gmra.mrb[0].mxu0 %v211
    %v247 = vpop.f32.mrb[0].mxu0
    %v248 = vadd.f32 %v122, %v247
    %v249 = vpop.f32.mrb[0].mxu0
    %v250 = vadd.f32 %v126, %v249
    %v251 = vpop.f32.mrb[0].mxu0
    %v252 = vpop.f32.mrb[0].mxu0
    %253 = vdwg.mxu0
    %254 = vmatprep.subr.bf16.mxu0 %v188
    %255 = vmatpush1.bf16.msra.mxu0 %v187
    %256 = vmatprep.subr.bf16.mxu0 %v194
    %257 = vmatpush1.bf16.msra.mxu0 %v193
    %258 = vmatprep.subr.bf16.mxu0 0
    %259 = vmatpush1.bf16.msra.mxu0 0
    %260 = vmatprep.subr.bf16.mxu0 0
    %261 = vmatpush1.bf16.msra.mxu0 0
    %262 = vmatprep.subr.bf16.mxu0 0
    %263 = vmatpush1.bf16.msra.mxu0 0
    %264 = vmatprep.subr.bf16.mxu0 0
    %265 = vmatpush1.bf16.msra.mxu0 0
    %266 = vmatprep.subr.bf16.mxu0 0
    %267 = vmatpush1.bf16.msra.mxu0 0
    %268 = vmatprep.subr.bf16.mxu0 0
    %269 = vmatpush1.bf16.msra.mxu0 0
    %270 = vmatprep.subr.bf16.mxu0 0
    %271 = vmatpush1.bf16.msra.mxu0 0
    %272 = vmatprep.subr.bf16.mxu0 0
    %273 = vmatpush1.bf16.msra.mxu0 0
    %274 = vmatprep.subr.bf16.mxu0 0
    %275 = vmatpush1.bf16.msra.mxu0 0
    %276 = vmatprep.subr.bf16.mxu0 0
    %277 = vmatpush1.bf16.msra.mxu0 0
    %278 = vmatprep.subr.bf16.mxu0 0
    %279 = vmatpush1.bf16.msra.mxu0 0
    %280 = vmatprep.subr.bf16.mxu0 0
    %281 = vmatpush1.bf16.msra.mxu0 0
    %282 = vmatprep.subr.bf16.mxu0 0
    %283 = vmatpush1.bf16.msra.mxu0 0
    %284 = vmatprep.subr.bf16.mxu0 0
    %285 = vmatpush1.bf16.msra.mxu0 0
    %286 = vmatprep.mubr.bf16.mxu0 0
    %287 = vmatmul.mubr.bf16.gmra.mrb[0].mxu0 %v211
    %v288 = vpop.f32.mrb[0].mxu0
    %v289 = vadd.f32 %v130, %v288
    %v290 = vpop.f32.mrb[0].mxu0
    %v291 = vadd.f32 %v134, %v290
    %v292 = vpop.f32.mrb[0].mxu0
    %v293 = vpop.f32.mrb[0].mxu0
    %294 = vdwg.mxu0
    %295 = vmatprep.subr.bf16.mxu0 %v190
    %296 = vmatpush1.bf16.msra.mxu0 %v189
    %297 = vmatprep.subr.bf16.mxu0 %v196
    %298 = vmatpush1.bf16.msra.mxu0 %v195
    %299 = vmatprep.subr.bf16.mxu0 0
    %300 = vmatpush1.bf16.msra.mxu0 0
    %301 = vmatprep.subr.bf16.mxu0 0
    %302 = vmatpush1.bf16.msra.mxu0 0
    %303 = vmatprep.subr.bf16.mxu0 0
    %304 = vmatpush1.bf16.msra.mxu0 0
    %305 = vmatprep.subr.bf16.mxu0 0
    %306 = vmatpush1.bf16.msra.mxu0 0
    %307 = vmatprep.subr.bf16.mxu0 0
    %308 = vmatpush1.bf16.msra.mxu0 0
    %309 = vmatprep.subr.bf16.mxu0 0
    %310 = vmatpush1.bf16.msra.mxu0 0
    %311 = vmatprep.subr.bf16.mxu0 0
    %312 = vmatpush1.bf16.msra.mxu0 0
    %313 = vmatprep.subr.bf16.mxu0 0
    %314 = vmatpush1.bf16.msra.mxu0 0
    %315 = vmatprep.subr.bf16.mxu0 0
    %316 = vmatpush1.bf16.msra.mxu0 0
    %317 = vmatprep.subr.bf16.mxu0 0
    %318 = vmatpush1.bf16.msra.mxu0 0
    %319 = vmatprep.subr.bf16.mxu0 0
    %320 = vmatpush1.bf16.msra.mxu0 0
    %321 = vmatprep.subr.bf16.mxu0 0
    %322 = vmatpush1.bf16.msra.mxu0 0
    %323 = vmatprep.subr.bf16.mxu0 0
    %324 = vmatpush1.bf16.msra.mxu0 0
    %325 = vmatprep.subr.bf16.mxu0 0
    %326 = vmatpush1.bf16.msra.mxu0 0
    %327 = vmatprep.mubr.bf16.mxu0 0
    %328 = vmatmul.mubr.bf16.gmra.mrb[0].mxu0 %v211
    %v329 = vpop.f32.mrb[0].mxu0
    %v330 = vadd.f32 %v138, %v329
    %v331 = vpop.f32.mrb[0].mxu0
    %v332 = vadd.f32 %v142, %v331
    %v333 = vpop.f32.mrb[0].mxu0
    %v334 = vpop.f32.mrb[0].mxu0
    %335 = vdwg.mxu0
    %v336 = vmul.f32 %v248, 0.01
    %v337 = vmul.f32 %v250, 0.01
    %v338 = vmul.f32 %v289, 0.01
    %v339 = vmul.f32 %v291, 0.01
    %v340 = vmul.f32 %v330, 0.01
    %v341 = vmul.f32 %v332, 0.01
    %v342 = vmax.f32 %v248, %v336
    %v343 = vmax.f32 %v250, %v337
    %v344 = vmax.f32 %v289, %v338
    %v345 = vmax.f32 %v291, %v339
    %v346 = vmax.f32 %v330, %v340
    %v347 = vmax.f32 %v332, %v341
    %v348 = vpack.c.bf16 %v342, %v342
    %v349 = vpack.c.bf16 %v343, %v343
    %v350 = vpack.c.bf16 %v344, %v344
    %v351 = vpack.c.bf16 %v345, %v345
    %v352 = vpack.c.bf16 %v346, %v346
    %v353 = vpack.c.bf16 %v347, %v347
    %v354 = vld [vmem:[#allocation8] sm:$0xff]
    %v355 = vld [vmem:[#allocation8 + $0x8] sm:$0xff]
    %v356 = vld [vmem:[#allocation8 + $0x10] sm:$0xff]
    %v357 = vld [vmem:[#allocation8 + $0x18] sm:$0xff]
    %v358 = vld [vmem:[#allocation8 + $0x20] sm:$0xff]
    %v359 = vld [vmem:[#allocation8 + $0x28] sm:$0xff]
    %v360 = vld [vmem:[#allocation8 + $0x30] sm:$0xff]
    %v361 = vld [vmem:[#allocation8 + $0x38] sm:$0xff]
    %v362 = vld [vmem:[#allocation8 + $0x40] sm:$0xff]
    %v363 = vld [vmem:[#allocation8 + $0x48] sm:$0xff]
    %v364 = vld [vmem:[#allocation8 + $0x50] sm:$0xff]
    %v365 = vld [vmem:[#allocation8 + $0x58] sm:$0xff]
    %v366 = vld [vmem:[#allocation8 + $0x60] sm:$0xff]
    %v367 = vld [vmem:[#allocation8 + $0x68] sm:$0xff]
    %v368 = vld [vmem:[#allocation8 + $0x70] sm:$0xff]
    %v369 = vld [vmem:[#allocation8 + $0x78] sm:$0xff]
    %v370 = vld [vmem:[#allocation8 + $0x80] sm:$0xff]
    %v371 = vld [vmem:[#allocation8 + $0x88] sm:$0xff]
    %v372 = vld [vmem:[#allocation8 + $0x90] sm:$0xff]
    %v373 = vld [vmem:[#allocation8 + $0x98] sm:$0xff]
    %v374 = vld [vmem:[#allocation8 + $0xa0] sm:$0xff]
    %v375 = vld [vmem:[#allocation8 + $0xa8] sm:$0xff]
    %v376 = vld [vmem:[#allocation8 + $0xb0] sm:$0xff]
    %v377 = vld [vmem:[#allocation8 + $0xb8] sm:$0xff]
    %v378 = vld [vmem:[#allocation8 + $0xc0] sm:$0xff]
    %v379 = vld [vmem:[#allocation8 + $0xc8] sm:$0xff]
    %v380 = vld [vmem:[#allocation8 + $0xd0] sm:$0xff]
    %v381 = vld [vmem:[#allocation8 + $0xd8] sm:$0xff]
    %v382 = vld [vmem:[#allocation8 + $0xe0] sm:$0xff]
    %v383 = vld [vmem:[#allocation8 + $0xe8] sm:$0xff]
    %v384 = vld [vmem:[#allocation8 + $0xf0] sm:$0xff]
    %v385 = vld [vmem:[#allocation8 + $0xf8] sm:$0xff]
    %v386 = vld [vmem:[#allocation8 + $0x100] sm:$0xff]
    %v387 = vld [vmem:[#allocation8 + $0x108] sm:$0xff]
    %v388 = vld [vmem:[#allocation8 + $0x110] sm:$0xff]
    %v389 = vld [vmem:[#allocation8 + $0x118] sm:$0xff]
    %v390 = vld [vmem:[#allocation8 + $0x120] sm:$0xff]
    %v391 = vld [vmem:[#allocation8 + $0x128] sm:$0xff]
    %v392 = vld [vmem:[#allocation8 + $0x130] sm:$0xff]
    %v393 = vld [vmem:[#allocation8 + $0x138] sm:$0xff]
    %v394 = vld [vmem:[#allocation8 + $0x140] sm:$0xff]
    %v395 = vld [vmem:[#allocation8 + $0x148] sm:$0xff]
    %v396 = vld [vmem:[#allocation8 + $0x150] sm:$0xff]
    %v397 = vld [vmem:[#allocation8 + $0x158] sm:$0xff]
    %v398 = vld [vmem:[#allocation8 + $0x160] sm:$0xff]
    %v399 = vld [vmem:[#allocation8 + $0x168] sm:$0xff]
    %v400 = vld [vmem:[#allocation8 + $0x170] sm:$0xff]
    %v401 = vld [vmem:[#allocation8 + $0x178] sm:$0xff]
    %v402 = vld [vmem:[#allocation8 + $0x180] sm:$0xff]
    %v403 = vld [vmem:[#allocation8 + $0x188] sm:$0xff]
    %v404 = vld [vmem:[#allocation8 + $0x190] sm:$0xff]
    %v405 = vld [vmem:[#allocation8 + $0x198] sm:$0xff]
    %v406 = vld [vmem:[#allocation8 + $0x1a0] sm:$0xff]
    %v407 = vld [vmem:[#allocation8 + $0x1a8] sm:$0xff]
    %v408 = vld [vmem:[#allocation8 + $0x1b0] sm:$0xff]
    %v409 = vld [vmem:[#allocation8 + $0x1b8] sm:$0xff]
    %v410 = vld [vmem:[#allocation8 + $0x1c0] sm:$0xff]
    %v411 = vld [vmem:[#allocation8 + $0x1c8] sm:$0xff]
    %v412 = vld [vmem:[#allocation8 + $0x1d0] sm:$0xff]
    %v413 = vld [vmem:[#allocation8 + $0x1d8] sm:$0xff]
    %v414 = vld [vmem:[#allocation8 + $0x1e0] sm:$0xff]
    %v415 = vld [vmem:[#allocation8 + $0x1e8] sm:$0xff]
    %v416 = vld [vmem:[#allocation8 + $0x1f0] sm:$0xff]
    %v417 = vld [vmem:[#allocation8 + $0x1f8] sm:$0xff]
    %v418 = vld [vmem:[#allocation8 + $0x200] sm:$0xff]
    %v419 = vld [vmem:[#allocation8 + $0x208] sm:$0xff]
    %v420 = vld [vmem:[#allocation8 + $0x210] sm:$0xff]
    %v421 = vld [vmem:[#allocation8 + $0x218] sm:$0xff]
    %v422 = vld [vmem:[#allocation8 + $0x220] sm:$0xff]
    %v423 = vld [vmem:[#allocation8 + $0x228] sm:$0xff]
    %v424 = vld [vmem:[#allocation8 + $0x230] sm:$0xff]
    %v425 = vld [vmem:[#allocation8 + $0x238] sm:$0xff]
    %v426 = vld [vmem:[#allocation8 + $0x240] sm:$0xff]
    %v427 = vld [vmem:[#allocation8 + $0x248] sm:$0xff]
    %v428 = vld [vmem:[#allocation8 + $0x250] sm:$0xff]
    %v429 = vld [vmem:[#allocation8 + $0x258] sm:$0xff]
    %v430 = vld [vmem:[#allocation8 + $0x260] sm:$0xff]
    %v431 = vld [vmem:[#allocation8 + $0x268] sm:$0xff]
    %v432 = vld [vmem:[#allocation8 + $0x270] sm:$0xff]
    %v433 = vld [vmem:[#allocation8 + $0x278] sm:$0xff]
    %v434 = vld [vmem:[#allocation8 + $0x280] sm:$0xff]
    %v435 = vld [vmem:[#allocation8 + $0x288] sm:$0xff]
    %v436 = vld [vmem:[#allocation8 + $0x290] sm:$0xff]
    %v437 = vld [vmem:[#allocation8 + $0x298] sm:$0xff]
    %v438 = vld [vmem:[#allocation8 + $0x2a0] sm:$0xff]
    %v439 = vld [vmem:[#allocation8 + $0x2a8] sm:$0xff]
    %v440 = vld [vmem:[#allocation8 + $0x2b0] sm:$0xff]
    %v441 = vld [vmem:[#allocation8 + $0x2b8] sm:$0xff]
    %v442 = vld [vmem:[#allocation8 + $0x2c0] sm:$0xff]
    %v443 = vld [vmem:[#allocation8 + $0x2c8] sm:$0xff]
    %v444 = vld [vmem:[#allocation8 + $0x2d0] sm:$0xff]
    %v445 = vld [vmem:[#allocation8 + $0x2d8] sm:$0xff]
    %v446 = vld [vmem:[#allocation8 + $0x2e0] sm:$0xff]
    %v447 = vld [vmem:[#allocation8 + $0x2e8] sm:$0xff]
    %v448 = vld [vmem:[#allocation8 + $0x2f0] sm:$0xff]
    %v449 = vld [vmem:[#allocation8 + $0x2f8] sm:$0xff]
    %v450 = vld [vmem:[#allocation8 + $0x300] sm:$0xff]
    %v451 = vld [vmem:[#allocation8 + $0x308] sm:$0xff]
    %v452 = vld [vmem:[#allocation8 + $0x310] sm:$0xff]
    %v453 = vld [vmem:[#allocation8 + $0x318] sm:$0xff]
    %v454 = vld [vmem:[#allocation8 + $0x320] sm:$0xff]
    %v455 = vld [vmem:[#allocation8 + $0x328] sm:$0xff]
    %v456 = vld [vmem:[#allocation8 + $0x330] sm:$0xff]
    %v457 = vld [vmem:[#allocation8 + $0x338] sm:$0xff]
    %v458 = vld [vmem:[#allocation8 + $0x340] sm:$0xff]
    %v459 = vld [vmem:[#allocation8 + $0x348] sm:$0xff]
    %v460 = vld [vmem:[#allocation8 + $0x350] sm:$0xff]
    %v461 = vld [vmem:[#allocation8 + $0x358] sm:$0xff]
    %v462 = vld [vmem:[#allocation8 + $0x360] sm:$0xff]
    %v463 = vld [vmem:[#allocation8 + $0x368] sm:$0xff]
    %v464 = vld [vmem:[#allocation8 + $0x370] sm:$0xff]
    %v465 = vld [vmem:[#allocation8 + $0x378] sm:$0xff]
    %v466 = vld [vmem:[#allocation8 + $0x380] sm:$0xff]
    %v467 = vld [vmem:[#allocation8 + $0x388] sm:$0xff]
    %v468 = vld [vmem:[#allocation8 + $0x390] sm:$0xff]
    %v469 = vld [vmem:[#allocation8 + $0x398] sm:$0xff]
    %v470 = vld [vmem:[#allocation8 + $0x3a0] sm:$0xff]
    %v471 = vld [vmem:[#allocation8 + $0x3a8] sm:$0xff]
    %v472 = vld [vmem:[#allocation8 + $0x3b0] sm:$0xff]
    %v473 = vld [vmem:[#allocation8 + $0x3b8] sm:$0xff]
    %v474 = vld [vmem:[#allocation8 + $0x3c0] sm:$0xff]
    %v475 = vld [vmem:[#allocation8 + $0x3c8] sm:$0xff]
    %v476 = vld [vmem:[#allocation8 + $0x3d0] sm:$0xff]
    %v477 = vld [vmem:[#allocation8 + $0x3d8] sm:$0xff]
    %v478 = vld [vmem:[#allocation8 + $0x3e0] sm:$0xff]
    %v479 = vld [vmem:[#allocation8 + $0x3e8] sm:$0xff]
    %v480 = vld [vmem:[#allocation8 + $0x3f0] sm:$0xff]
    %v481 = vld [vmem:[#allocation8 + $0x3f8] sm:$0xff]
    %v482 = vld [vmem:[#allocation8 + $0x400] sm:$0xff]
    %v483 = vld [vmem:[#allocation8 + $0x408] sm:$0xff]
    %v484 = vld [vmem:[#allocation8 + $0x410] sm:$0xff]
    %v485 = vld [vmem:[#allocation8 + $0x418] sm:$0xff]
    %v486 = vld [vmem:[#allocation8 + $0x420] sm:$0xff]
    %v487 = vld [vmem:[#allocation8 + $0x428] sm:$0xff]
    %v488 = vld [vmem:[#allocation8 + $0x430] sm:$0xff]
    %v489 = vld [vmem:[#allocation8 + $0x438] sm:$0xff]
    %v490 = vld [vmem:[#allocation8 + $0x440] sm:$0xff]
    %v491 = vld [vmem:[#allocation8 + $0x448] sm:$0xff]
    %v492 = vld [vmem:[#allocation8 + $0x450] sm:$0xff]
    %v493 = vld [vmem:[#allocation8 + $0x458] sm:$0xff]
    %v494 = vld [vmem:[#allocation8 + $0x460] sm:$0xff]
    %v495 = vld [vmem:[#allocation8 + $0x468] sm:$0xff]
    %v496 = vld [vmem:[#allocation8 + $0x470] sm:$0xff]
    %v497 = vld [vmem:[#allocation8 + $0x478] sm:$0xff]
    %v498 = vld [vmem:[#allocation8 + $0x480] sm:$0xff]
    %v499 = vld [vmem:[#allocation8 + $0x488] sm:$0xff]
    %v500 = vld [vmem:[#allocation8 + $0x490] sm:$0xff]
    %v501 = vld [vmem:[#allocation8 + $0x498] sm:$0xff]
    %v502 = vld [vmem:[#allocation8 + $0x4a0] sm:$0xff]
    %v503 = vld [vmem:[#allocation8 + $0x4a8] sm:$0xff]
    %v504 = vld [vmem:[#allocation8 + $0x4b0] sm:$0xff]
    %v505 = vld [vmem:[#allocation8 + $0x4b8] sm:$0xff]
    %v506 = vld [vmem:[#allocation8 + $0x4c0] sm:$0xff]
    %v507 = vld [vmem:[#allocation8 + $0x4c8] sm:$0xff]
    %v508 = vld [vmem:[#allocation8 + $0x4d0] sm:$0xff]
    %v509 = vld [vmem:[#allocation8 + $0x4d8] sm:$0xff]
    %v510 = vld [vmem:[#allocation8 + $0x4e0] sm:$0xff]
    %v511 = vld [vmem:[#allocation8 + $0x4e8] sm:$0xff]
    %v512 = vld [vmem:[#allocation8 + $0x4f0] sm:$0xff]
    %v513 = vld [vmem:[#allocation8 + $0x4f8] sm:$0xff]
    %v514 = vld [vmem:[#allocation8 + $0x500] sm:$0xff]
    %v515 = vld [vmem:[#allocation8 + $0x508] sm:$0xff]
    %v516 = vld [vmem:[#allocation8 + $0x510] sm:$0xff]
    %v517 = vld [vmem:[#allocation8 + $0x518] sm:$0xff]
    %v518 = vld [vmem:[#allocation8 + $0x520] sm:$0xff]
    %v519 = vld [vmem:[#allocation8 + $0x528] sm:$0xff]
    %v520 = vld [vmem:[#allocation8 + $0x530] sm:$0xff]
    %v521 = vld [vmem:[#allocation8 + $0x538] sm:$0xff]
    %v522 = vld [vmem:[#allocation8 + $0x540] sm:$0xff]
    %v523 = vld [vmem:[#allocation8 + $0x548] sm:$0xff]
    %v524 = vld [vmem:[#allocation8 + $0x550] sm:$0xff]
    %v525 = vld [vmem:[#allocation8 + $0x558] sm:$0xff]
    %v526 = vld [vmem:[#allocation8 + $0x560] sm:$0xff]
    %v527 = vld [vmem:[#allocation8 + $0x568] sm:$0xff]
    %v528 = vld [vmem:[#allocation8 + $0x570] sm:$0xff]
    %v529 = vld [vmem:[#allocation8 + $0x578] sm:$0xff]
    %v530 = vld [vmem:[#allocation8 + $0x580] sm:$0xff]
    %v531 = vld [vmem:[#allocation8 + $0x588] sm:$0xff]
    %v532 = vld [vmem:[#allocation8 + $0x590] sm:$0xff]
    %v533 = vld [vmem:[#allocation8 + $0x598] sm:$0xff]
    %v534 = vld [vmem:[#allocation8 + $0x5a0] sm:$0xff]
    %v535 = vld [vmem:[#allocation8 + $0x5a8] sm:$0xff]
    %v536 = vld [vmem:[#allocation8 + $0x5b0] sm:$0xff]
    %v537 = vld [vmem:[#allocation8 + $0x5b8] sm:$0xff]
    %v538 = vld [vmem:[#allocation8 + $0x5c0] sm:$0xff]
    %v539 = vld [vmem:[#allocation8 + $0x5c8] sm:$0xff]
    %v540 = vld [vmem:[#allocation8 + $0x5d0] sm:$0xff]
    %v541 = vld [vmem:[#allocation8 + $0x5d8] sm:$0xff]
    %v542 = vld [vmem:[#allocation8 + $0x5e0] sm:$0xff]
    %v543 = vld [vmem:[#allocation8 + $0x5e8] sm:$0xff]
    %v544 = vld [vmem:[#allocation8 + $0x5f0] sm:$0xff]
    %v545 = vld [vmem:[#allocation8 + $0x5f8] sm:$0xff]
    %v546 = vld [vmem:[#allocation8 + $0x600] sm:$0xff]
    %v547 = vld [vmem:[#allocation8 + $0x608] sm:$0xff]
    %v548 = vld [vmem:[#allocation8 + $0x610] sm:$0xff]
    %v549 = vld [vmem:[#allocation8 + $0x618] sm:$0xff]
    %v550 = vld [vmem:[#allocation8 + $0x620] sm:$0xff]
    %v551 = vld [vmem:[#allocation8 + $0x628] sm:$0xff]
    %v552 = vld [vmem:[#allocation8 + $0x630] sm:$0xff]
    %v553 = vld [vmem:[#allocation8 + $0x638] sm:$0xff]
    %v554 = vld [vmem:[#allocation8 + $0x640] sm:$0xff]
    %v555 = vld [vmem:[#allocation8 + $0x648] sm:$0xff]
    %v556 = vld [vmem:[#allocation8 + $0x650] sm:$0xff]
    %v557 = vld [vmem:[#allocation8 + $0x658] sm:$0xff]
    %v558 = vld [vmem:[#allocation8 + $0x660] sm:$0xff]
    %v559 = vld [vmem:[#allocation8 + $0x668] sm:$0xff]
    %v560 = vld [vmem:[#allocation8 + $0x670] sm:$0xff]
    %v561 = vld [vmem:[#allocation8 + $0x678] sm:$0xff]
    %v562 = vld [vmem:[#allocation8 + $0x680] sm:$0xff]
    %v563 = vld [vmem:[#allocation8 + $0x688] sm:$0xff]
    %v564 = vld [vmem:[#allocation8 + $0x690] sm:$0xff]
    %v565 = vld [vmem:[#allocation8 + $0x698] sm:$0xff]
    %v566 = vld [vmem:[#allocation8 + $0x6a0] sm:$0xff]
    %v567 = vld [vmem:[#allocation8 + $0x6a8] sm:$0xff]
    %v568 = vld [vmem:[#allocation8 + $0x6b0] sm:$0xff]
    %v569 = vld [vmem:[#allocation8 + $0x6b8] sm:$0xff]
    %v570 = vld [vmem:[#allocation8 + $0x6c0] sm:$0xff]
    %v571 = vld [vmem:[#allocation8 + $0x6c8] sm:$0xff]
    %v572 = vld [vmem:[#allocation8 + $0x6d0] sm:$0xff]
    %v573 = vld [vmem:[#allocation8 + $0x6d8] sm:$0xff]
    %v574 = vld [vmem:[#allocation8 + $0x6e0] sm:$0xff]
    %v575 = vld [vmem:[#allocation8 + $0x6e8] sm:$0xff]
    %v576 = vld [vmem:[#allocation8 + $0x6f0] sm:$0xff]
    %v577 = vld [vmem:[#allocation8 + $0x6f8] sm:$0xff]
    %v578 = vld [vmem:[#allocation8 + $0x700] sm:$0xff]
    %v579 = vld [vmem:[#allocation8 + $0x708] sm:$0xff]
    %v580 = vld [vmem:[#allocation8 + $0x710] sm:$0xff]
    %v581 = vld [vmem:[#allocation8 + $0x718] sm:$0xff]
    %v582 = vld [vmem:[#allocation8 + $0x720] sm:$0xff]
    %v583 = vld [vmem:[#allocation8 + $0x728] sm:$0xff]
    %v584 = vld [vmem:[#allocation8 + $0x730] sm:$0xff]
    %v585 = vld [vmem:[#allocation8 + $0x738] sm:$0xff]
    %v586 = vld [vmem:[#allocation8 + $0x740] sm:$0xff]
    %v587 = vld [vmem:[#allocation8 + $0x748] sm:$0xff]
    %v588 = vld [vmem:[#allocation8 + $0x750] sm:$0xff]
    %v589 = vld [vmem:[#allocation8 + $0x758] sm:$0xff]
    %v590 = vld [vmem:[#allocation8 + $0x760] sm:$0xff]
    %v591 = vld [vmem:[#allocation8 + $0x768] sm:$0xff]
    %v592 = vld [vmem:[#allocation8 + $0x770] sm:$0xff]
    %v593 = vld [vmem:[#allocation8 + $0x778] sm:$0xff]
    %v594 = vld [vmem:[#allocation8 + $0x780] sm:$0xff]
    %v595 = vld [vmem:[#allocation8 + $0x788] sm:$0xff]
    %v596 = vld [vmem:[#allocation8 + $0x790] sm:$0xff]
    %v597 = vld [vmem:[#allocation8 + $0x798] sm:$0xff]
    %v598 = vld [vmem:[#allocation8 + $0x7a0] sm:$0xff]
    %v599 = vld [vmem:[#allocation8 + $0x7a8] sm:$0xff]
    %v600 = vld [vmem:[#allocation8 + $0x7b0] sm:$0xff]
    %v601 = vld [vmem:[#allocation8 + $0x7b8] sm:$0xff]
    %v602 = vld [vmem:[#allocation8 + $0x7c0] sm:$0xff]
    %v603 = vld [vmem:[#allocation8 + $0x7c8] sm:$0xff]
    %v604 = vld [vmem:[#allocation8 + $0x7d0] sm:$0xff]
    %v605 = vld [vmem:[#allocation8 + $0x7d8] sm:$0xff]
    %v606 = vld [vmem:[#allocation8 + $0x7e0] sm:$0xff]
    %v607 = vld [vmem:[#allocation8 + $0x7e8] sm:$0xff]
    %v608 = vld [vmem:[#allocation8 + $0x7f0] sm:$0xff]
    %v609 = vld [vmem:[#allocation8 + $0x7f8] sm:$0xff]
    %v610 = vld [vmem:[#allocation8 + $0x800] sm:$0xff]
    %v611 = vld [vmem:[#allocation8 + $0x808] sm:$0xff]
    %v612 = vld [vmem:[#allocation8 + $0x810] sm:$0xff]
    %v613 = vld [vmem:[#allocation8 + $0x818] sm:$0xff]
    %v614 = vld [vmem:[#allocation8 + $0x820] sm:$0xff]
    %v615 = vld [vmem:[#allocation8 + $0x828] sm:$0xff]
    %v616 = vld [vmem:[#allocation8 + $0x830] sm:$0xff]
    %v617 = vld [vmem:[#allocation8 + $0x838] sm:$0xff]
    %v618 = vld [vmem:[#allocation8 + $0x840] sm:$0xff]
    %v619 = vld [vmem:[#allocation8 + $0x848] sm:$0xff]
    %v620 = vld [vmem:[#allocation8 + $0x850] sm:$0xff]
    %v621 = vld [vmem:[#allocation8 + $0x858] sm:$0xff]
    %v622 = vld [vmem:[#allocation8 + $0x860] sm:$0xff]
    %v623 = vld [vmem:[#allocation8 + $0x868] sm:$0xff]
    %v624 = vld [vmem:[#allocation8 + $0x870] sm:$0xff]
    %v625 = vld [vmem:[#allocation8 + $0x878] sm:$0xff]
    %v626 = vld [vmem:[#allocation8 + $0x880] sm:$0xff]
    %v627 = vld [vmem:[#allocation8 + $0x888] sm:$0xff]
    %v628 = vld [vmem:[#allocation8 + $0x890] sm:$0xff]
    %v629 = vld [vmem:[#allocation8 + $0x898] sm:$0xff]
    %v630 = vld [vmem:[#allocation8 + $0x8a0] sm:$0xff]
    %v631 = vld [vmem:[#allocation8 + $0x8a8] sm:$0xff]
    %v632 = vld [vmem:[#allocation8 + $0x8b0] sm:$0xff]
    %v633 = vld [vmem:[#allocation8 + $0x8b8] sm:$0xff]
    %v634 = vld [vmem:[#allocation8 + $0x8c0] sm:$0xff]
    %v635 = vld [vmem:[#allocation8 + $0x8c8] sm:$0xff]
    %v636 = vld [vmem:[#allocation8 + $0x8d0] sm:$0xff]
    %v637 = vld [vmem:[#allocation8 + $0x8d8] sm:$0xff]
    %v638 = vld [vmem:[#allocation8 + $0x8e0] sm:$0xff]
    %v639 = vld [vmem:[#allocation8 + $0x8e8] sm:$0xff]
    %v640 = vld [vmem:[#allocation8 + $0x8f0] sm:$0xff]
    %v641 = vld [vmem:[#allocation8 + $0x8f8] sm:$0xff]
    %v642 = vld [vmem:[#allocation10] sm:$0x3f]
    %v644 = vlaneseq
    %v645 = vshrl.u32 %v644, 7
    %v646 = vsub.s32 0, %v645
    %v647 = vrot.slane %v642, %v646
    %v648 = vlaneseq
    %v649 = vshrl.u32 %v648, 7
    %v650 = vsub.s32 1, %v649
    %v651 = vrot.slane %v642, %v650
    %v652 = vlaneseq
    %v653 = vshrl.u32 %v652, 7
    %v654 = vsub.s32 2, %v653
    %v655 = vrot.slane %v642, %v654
    %v656 = vlaneseq
    %v657 = vshrl.u32 %v656, 7
    %v658 = vsub.s32 3, %v657
    %v659 = vrot.slane %v642, %v658
    %v660 = vlaneseq
    %v661 = vshrl.u32 %v660, 7
    %v662 = vsub.s32 4, %v661
    %v663 = vrot.slane %v642, %v662
    %v664 = vlaneseq
    %v665 = vshrl.u32 %v664, 7
    %v666 = vsub.s32 5, %v665
    %v667 = vrot.slane %v642, %v666
    %v962 = vunpack.c.l.b16 %v354
    %v963 = vunpack.c.h.b16 %v354
    %v964 = vunpack.c.l.b16 %v355
    %v965 = vunpack.c.h.b16 %v355
    %v966 = vunpack.c.l.b16 %v356
    %v967 = vunpack.c.h.b16 %v356
    %v968 = vunpack.c.l.b16 %v357
    %v969 = vunpack.c.h.b16 %v357
    %v970 = vunpack.c.l.b16 %v358
    %v971 = vunpack.c.h.b16 %v358
    %v972 = vunpack.c.l.b16 %v359
    %v973 = vunpack.c.h.b16 %v359
    %v974 = vunpack.c.l.b16 %v360
    %v975 = vunpack.c.h.b16 %v360
    %v976 = vunpack.c.l.b16 %v361
    %v977 = vunpack.c.h.b16 %v361
    %v978 = vunpack.c.l.b16 %v362
    %v979 = vunpack.c.h.b16 %v362
    %v980 = vunpack.c.l.b16 %v363
    %v981 = vunpack.c.h.b16 %v363
    %v982 = vunpack.c.l.b16 %v364
    %v983 = vunpack.c.h.b16 %v364
    %v984 = vunpack.c.l.b16 %v365
    %v985 = vunpack.c.h.b16 %v365
    %v986 = vunpack.c.l.b16 %v366
    %v987 = vunpack.c.h.b16 %v366
    %v988 = vunpack.c.l.b16 %v367
    %v989 = vunpack.c.h.b16 %v367
    %v990 = vunpack.c.l.b16 %v368
    %v991 = vunpack.c.h.b16 %v368
    %v992 = vunpack.c.l.b16 %v369
    %v993 = vunpack.c.h.b16 %v369
    %v994 = vunpack.c.l.b16 %v370
    %v995 = vunpack.c.h.b16 %v370
    %v996 = vunpack.c.l.b16 %v371
    %v997 = vunpack.c.h.b16 %v371
    %v998 = vunpack.c.l.b16 %v372
    %v999 = vunpack.c.h.b16 %v372
    %v1000 = vunpack.c.l.b16 %v373
    %v1001 = vunpack.c.h.b16 %v373
    %v1002 = vunpack.c.l.b16 %v374
    %v1003 = vunpack.c.h.b16 %v374
    %v1004 = vunpack.c.l.b16 %v375
    %v1005 = vunpack.c.h.b16 %v375
    %v1006 = vunpack.c.l.b16 %v376
    %v1007 = vunpack.c.h.b16 %v376
    %v1008 = vunpack.c.l.b16 %v377
    %v1009 = vunpack.c.h.b16 %v377
    %v1010 = vunpack.c.l.b16 %v378
    %v1011 = vunpack.c.h.b16 %v378
    %v1012 = vunpack.c.l.b16 %v379
    %v1013 = vunpack.c.h.b16 %v379
    %v1014 = vunpack.c.l.b16 %v380
    %v1015 = vunpack.c.h.b16 %v380
    %v1016 = vunpack.c.l.b16 %v381
    %v1017 = vunpack.c.h.b16 %v381
    %v1018 = vunpack.c.l.b16 %v382
    %v1019 = vunpack.c.h.b16 %v382
    %v1020 = vunpack.c.l.b16 %v383
    %v1021 = vunpack.c.h.b16 %v383
    %v1022 = vunpack.c.l.b16 %v384
    %v1023 = vunpack.c.h.b16 %v384
    %v1024 = vunpack.c.l.b16 %v385
    %v1025 = vunpack.c.h.b16 %v385
    %v1026 = vunpack.c.l.b16 %v386
    %v1027 = vunpack.c.h.b16 %v386
    %v1028 = vunpack.c.l.b16 %v387
    %v1029 = vunpack.c.h.b16 %v387
    %v1030 = vunpack.c.l.b16 %v388
    %v1031 = vunpack.c.h.b16 %v388
    %v1032 = vunpack.c.l.b16 %v389
    %v1033 = vunpack.c.h.b16 %v389
    %v1034 = vunpack.c.l.b16 %v390
    %v1035 = vunpack.c.h.b16 %v390
    %v1036 = vunpack.c.l.b16 %v391
    %v1037 = vunpack.c.h.b16 %v391
    %v1038 = vunpack.c.l.b16 %v392
    %v1039 = vunpack.c.h.b16 %v392
    %v1040 = vunpack.c.l.b16 %v393
    %v1041 = vunpack.c.h.b16 %v393
    %v1042 = vunpack.c.l.b16 %v394
    %v1043 = vunpack.c.h.b16 %v394
    %v1044 = vunpack.c.l.b16 %v395
    %v1045 = vunpack.c.h.b16 %v395
    %v1046 = vunpack.c.l.b16 %v396
    %v1047 = vunpack.c.h.b16 %v396
    %v1048 = vunpack.c.l.b16 %v397
    %v1049 = vunpack.c.h.b16 %v397
    %v1050 = vunpack.c.l.b16 %v398
    %v1051 = vunpack.c.h.b16 %v398
    %v1052 = vunpack.c.l.b16 %v399
    %v1053 = vunpack.c.h.b16 %v399
    %v1054 = vunpack.c.l.b16 %v400
    %v1055 = vunpack.c.h.b16 %v400
    %v1056 = vunpack.c.l.b16 %v401
    %v1057 = vunpack.c.h.b16 %v401
    %v1058 = vunpack.c.l.b16 %v402
    %v1059 = vunpack.c.h.b16 %v402
    %v1060 = vunpack.c.l.b16 %v403
    %v1061 = vunpack.c.h.b16 %v403
    %v1062 = vunpack.c.l.b16 %v404
    %v1063 = vunpack.c.h.b16 %v404
    %v1064 = vunpack.c.l.b16 %v405
    %v1065 = vunpack.c.h.b16 %v405
    %v1066 = vunpack.c.l.b16 %v406
    %v1067 = vunpack.c.h.b16 %v406
    %v1068 = vunpack.c.l.b16 %v407
    %v1069 = vunpack.c.h.b16 %v407
    %v1070 = vunpack.c.l.b16 %v408
    %v1071 = vunpack.c.h.b16 %v408
    %v1072 = vunpack.c.l.b16 %v409
    %v1073 = vunpack.c.h.b16 %v409
    %v1074 = vunpack.c.l.b16 %v410
    %v1075 = vunpack.c.h.b16 %v410
    %v1076 = vunpack.c.l.b16 %v411
    %v1077 = vunpack.c.h.b16 %v411
    %v1078 = vunpack.c.l.b16 %v412
    %v1079 = vunpack.c.h.b16 %v412
    %v1080 = vunpack.c.l.b16 %v413
    %v1081 = vunpack.c.h.b16 %v413
    %v1082 = vunpack.c.l.b16 %v414
    %v1083 = vunpack.c.h.b16 %v414
    %v1084 = vunpack.c.l.b16 %v415
    %v1085 = vunpack.c.h.b16 %v415
    %v1086 = vunpack.c.l.b16 %v416
    %v1087 = vunpack.c.h.b16 %v416
    %v1088 = vunpack.c.l.b16 %v417
    %v1089 = vunpack.c.h.b16 %v417
    %v1090 = vunpack.c.l.b16 %v418
    %v1091 = vunpack.c.h.b16 %v418
    %v1092 = vunpack.c.l.b16 %v419
    %v1093 = vunpack.c.h.b16 %v419
    %v1094 = vunpack.c.l.b16 %v420
    %v1095 = vunpack.c.h.b16 %v420
    %v1096 = vunpack.c.l.b16 %v421
    %v1097 = vunpack.c.h.b16 %v421
    %v1098 = vunpack.c.l.b16 %v422
    %v1099 = vunpack.c.h.b16 %v422
    %v1100 = vunpack.c.l.b16 %v423
    %v1101 = vunpack.c.h.b16 %v423
    %v1102 = vunpack.c.l.b16 %v424
    %v1103 = vunpack.c.h.b16 %v424
    %v1104 = vunpack.c.l.b16 %v425
    %v1105 = vunpack.c.h.b16 %v425
    %v1106 = vunpack.c.l.b16 %v426
    %v1107 = vunpack.c.h.b16 %v426
    %v1108 = vunpack.c.l.b16 %v427
    %v1109 = vunpack.c.h.b16 %v427
    %v1110 = vunpack.c.l.b16 %v428
    %v1111 = vunpack.c.h.b16 %v428
    %v1112 = vunpack.c.l.b16 %v429
    %v1113 = vunpack.c.h.b16 %v429
    %v1114 = vunpack.c.l.b16 %v430
    %v1115 = vunpack.c.h.b16 %v430
    %v1116 = vunpack.c.l.b16 %v431
    %v1117 = vunpack.c.h.b16 %v431
    %v1118 = vunpack.c.l.b16 %v432
    %v1119 = vunpack.c.h.b16 %v432
    %v1120 = vunpack.c.l.b16 %v433
    %v1121 = vunpack.c.h.b16 %v433
    %v1122 = vunpack.c.l.b16 %v434
    %v1123 = vunpack.c.h.b16 %v434
    %v1124 = vunpack.c.l.b16 %v435
    %v1125 = vunpack.c.h.b16 %v435
    %v1126 = vunpack.c.l.b16 %v436
    %v1127 = vunpack.c.h.b16 %v436
    %v1128 = vunpack.c.l.b16 %v437
    %v1129 = vunpack.c.h.b16 %v437
    %v1130 = vunpack.c.l.b16 %v438
    %v1131 = vunpack.c.h.b16 %v438
    %v1132 = vunpack.c.l.b16 %v439
    %v1133 = vunpack.c.h.b16 %v439
    %v1134 = vunpack.c.l.b16 %v440
    %v1135 = vunpack.c.h.b16 %v440
    %v1136 = vunpack.c.l.b16 %v441
    %v1137 = vunpack.c.h.b16 %v441
    %v1138 = vunpack.c.l.b16 %v442
    %v1139 = vunpack.c.h.b16 %v442
    %v1140 = vunpack.c.l.b16 %v443
    %v1141 = vunpack.c.h.b16 %v443
    %v1142 = vunpack.c.l.b16 %v444
    %v1143 = vunpack.c.h.b16 %v444
    %v1144 = vunpack.c.l.b16 %v445
    %v1145 = vunpack.c.h.b16 %v445
    %v1146 = vunpack.c.l.b16 %v446
    %v1147 = vunpack.c.h.b16 %v446
    %v1148 = vunpack.c.l.b16 %v447
    %v1149 = vunpack.c.h.b16 %v447
    %v1150 = vunpack.c.l.b16 %v448
    %v1151 = vunpack.c.h.b16 %v448
    %v1152 = vunpack.c.l.b16 %v449
    %v1153 = vunpack.c.h.b16 %v449
    %v1154 = vunpack.c.l.b16 %v450
    %v1155 = vunpack.c.h.b16 %v450
    %v1156 = vunpack.c.l.b16 %v451
    %v1157 = vunpack.c.h.b16 %v451
    %v1158 = vunpack.c.l.b16 %v452
    %v1159 = vunpack.c.h.b16 %v452
    %v1160 = vunpack.c.l.b16 %v453
    %v1161 = vunpack.c.h.b16 %v453
    %v1162 = vunpack.c.l.b16 %v454
    %v1163 = vunpack.c.h.b16 %v454
    %v1164 = vunpack.c.l.b16 %v455
    %v1165 = vunpack.c.h.b16 %v455
    %v1166 = vunpack.c.l.b16 %v456
    %v1167 = vunpack.c.h.b16 %v456
    %v1168 = vunpack.c.l.b16 %v457
    %v1169 = vunpack.c.h.b16 %v457
    %v1170 = vunpack.c.l.b16 %v458
    %v1171 = vunpack.c.h.b16 %v458
    %v1172 = vunpack.c.l.b16 %v459
    %v1173 = vunpack.c.h.b16 %v459
    %v1174 = vunpack.c.l.b16 %v460
    %v1175 = vunpack.c.h.b16 %v460
    %v1176 = vunpack.c.l.b16 %v461
    %v1177 = vunpack.c.h.b16 %v461
    %v1178 = vunpack.c.l.b16 %v462
    %v1179 = vunpack.c.h.b16 %v462
    %v1180 = vunpack.c.l.b16 %v463
    %v1181 = vunpack.c.h.b16 %v463
    %v1182 = vunpack.c.l.b16 %v464
    %v1183 = vunpack.c.h.b16 %v464
    %v1184 = vunpack.c.l.b16 %v465
    %v1185 = vunpack.c.h.b16 %v465
    %v1186 = vunpack.c.l.b16 %v466
    %v1187 = vunpack.c.h.b16 %v466
    %v1188 = vunpack.c.l.b16 %v467
    %v1189 = vunpack.c.h.b16 %v467
    %v1190 = vunpack.c.l.b16 %v468
    %v1191 = vunpack.c.h.b16 %v468
    %v1192 = vunpack.c.l.b16 %v469
    %v1193 = vunpack.c.h.b16 %v469
    %v1194 = vunpack.c.l.b16 %v470
    %v1195 = vunpack.c.h.b16 %v470
    %v1196 = vunpack.c.l.b16 %v471
    %v1197 = vunpack.c.h.b16 %v471
    %v1198 = vunpack.c.l.b16 %v472
    %v1199 = vunpack.c.h.b16 %v472
    %v1200 = vunpack.c.l.b16 %v473
    %v1201 = vunpack.c.h.b16 %v473
    %v1202 = vunpack.c.l.b16 %v474
    %v1203 = vunpack.c.h.b16 %v474
    %v1204 = vunpack.c.l.b16 %v475
    %v1205 = vunpack.c.h.b16 %v475
    %v1206 = vunpack.c.l.b16 %v476
    %v1207 = vunpack.c.h.b16 %v476
    %v1208 = vunpack.c.l.b16 %v477
    %v1209 = vunpack.c.h.b16 %v477
    %v1210 = vunpack.c.l.b16 %v478
    %v1211 = vunpack.c.h.b16 %v478
    %v1212 = vunpack.c.l.b16 %v479
    %v1213 = vunpack.c.h.b16 %v479
    %v1214 = vunpack.c.l.b16 %v480
    %v1215 = vunpack.c.h.b16 %v480
    %v1216 = vunpack.c.l.b16 %v481
    %v1217 = vunpack.c.h.b16 %v481
    %v1218 = vunpack.c.l.b16 %v482
    %v1219 = vunpack.c.h.b16 %v482
    %v1220 = vunpack.c.l.b16 %v483
    %v1221 = vunpack.c.h.b16 %v483
    %v1222 = vunpack.c.l.b16 %v484
    %v1223 = vunpack.c.h.b16 %v484
    %v1224 = vunpack.c.l.b16 %v485
    %v1225 = vunpack.c.h.b16 %v485
    %v1226 = vunpack.c.l.b16 %v486
    %v1227 = vunpack.c.h.b16 %v486
    %v1228 = vunpack.c.l.b16 %v487
    %v1229 = vunpack.c.h.b16 %v487
    %v1230 = vunpack.c.l.b16 %v488
    %v1231 = vunpack.c.h.b16 %v488
    %v1232 = vunpack.c.l.b16 %v489
    %v1233 = vunpack.c.h.b16 %v489
    %v1234 = vunpack.c.l.b16 %v490
    %v1235 = vunpack.c.h.b16 %v490
    %v1236 = vunpack.c.l.b16 %v491
    %v1237 = vunpack.c.h.b16 %v491
    %v1238 = vunpack.c.l.b16 %v492
    %v1239 = vunpack.c.h.b16 %v492
    %v1240 = vunpack.c.l.b16 %v493
    %v1241 = vunpack.c.h.b16 %v493
    %v1242 = vunpack.c.l.b16 %v494
    %v1243 = vunpack.c.h.b16 %v494
    %v1244 = vunpack.c.l.b16 %v495
    %v1245 = vunpack.c.h.b16 %v495
    %v1246 = vunpack.c.l.b16 %v496
    %v1247 = vunpack.c.h.b16 %v496
    %v1248 = vunpack.c.l.b16 %v497
    %v1249 = vunpack.c.h.b16 %v497
    %v1250 = vunpack.c.l.b16 %v498
    %v1251 = vunpack.c.h.b16 %v498
    %v1252 = vunpack.c.l.b16 %v499
    %v1253 = vunpack.c.h.b16 %v499
    %v1254 = vunpack.c.l.b16 %v500
    %v1255 = vunpack.c.h.b16 %v500
    %v1256 = vunpack.c.l.b16 %v501
    %v1257 = vunpack.c.h.b16 %v501
    %v1258 = vunpack.c.l.b16 %v502
    %v1259 = vunpack.c.h.b16 %v502
    %v1260 = vunpack.c.l.b16 %v503
    %v1261 = vunpack.c.h.b16 %v503
    %v1262 = vunpack.c.l.b16 %v504
    %v1263 = vunpack.c.h.b16 %v504
    %v1264 = vunpack.c.l.b16 %v505
    %v1265 = vunpack.c.h.b16 %v505
    %v1266 = vunpack.c.l.b16 %v506
    %v1267 = vunpack.c.h.b16 %v506
    %v1268 = vunpack.c.l.b16 %v507
    %v1269 = vunpack.c.h.b16 %v507
    %v1270 = vunpack.c.l.b16 %v508
    %v1271 = vunpack.c.h.b16 %v508
    %v1272 = vunpack.c.l.b16 %v509
    %v1273 = vunpack.c.h.b16 %v509
    %v1274 = vunpack.c.l.b16 %v510
    %v1275 = vunpack.c.h.b16 %v510
    %v1276 = vunpack.c.l.b16 %v511
    %v1277 = vunpack.c.h.b16 %v511
    %v1278 = vunpack.c.l.b16 %v512
    %v1279 = vunpack.c.h.b16 %v512
    %v1280 = vunpack.c.l.b16 %v513
    %v1281 = vunpack.c.h.b16 %v513
    %v1282 = vunpack.c.l.b16 %v514
    %v1283 = vunpack.c.h.b16 %v514
    %v1284 = vunpack.c.l.b16 %v515
    %v1285 = vunpack.c.h.b16 %v515
    %v1286 = vunpack.c.l.b16 %v516
    %v1287 = vunpack.c.h.b16 %v516
    %v1288 = vunpack.c.l.b16 %v517
    %v1289 = vunpack.c.h.b16 %v517
    %v1290 = vunpack.c.l.b16 %v518
    %v1291 = vunpack.c.h.b16 %v518
    %v1292 = vunpack.c.l.b16 %v519
    %v1293 = vunpack.c.h.b16 %v519
    %v1294 = vunpack.c.l.b16 %v520
    %v1295 = vunpack.c.h.b16 %v520
    %v1296 = vunpack.c.l.b16 %v521
    %v1297 = vunpack.c.h.b16 %v521
    %v1298 = vunpack.c.l.b16 %v522
    %v1299 = vunpack.c.h.b16 %v522
    %v1300 = vunpack.c.l.b16 %v523
    %v1301 = vunpack.c.h.b16 %v523
    %v1302 = vunpack.c.l.b16 %v524
    %v1303 = vunpack.c.h.b16 %v524
    %v1304 = vunpack.c.l.b16 %v525
    %v1305 = vunpack.c.h.b16 %v525
    %v1306 = vunpack.c.l.b16 %v526
    %v1307 = vunpack.c.h.b16 %v526
    %v1308 = vunpack.c.l.b16 %v527
    %v1309 = vunpack.c.h.b16 %v527
    %v1310 = vunpack.c.l.b16 %v528
    %v1311 = vunpack.c.h.b16 %v528
    %v1312 = vunpack.c.l.b16 %v529
    %v1313 = vunpack.c.h.b16 %v529
    %v1314 = vunpack.c.l.b16 %v530
    %v1315 = vunpack.c.h.b16 %v530
    %v1316 = vunpack.c.l.b16 %v531
    %v1317 = vunpack.c.h.b16 %v531
    %v1318 = vunpack.c.l.b16 %v532
    %v1319 = vunpack.c.h.b16 %v532
    %v1320 = vunpack.c.l.b16 %v533
    %v1321 = vunpack.c.h.b16 %v533
    %v1322 = vunpack.c.l.b16 %v534
    %v1323 = vunpack.c.h.b16 %v534
    %v1324 = vunpack.c.l.b16 %v535
    %v1325 = vunpack.c.h.b16 %v535
    %v1326 = vunpack.c.l.b16 %v536
    %v1327 = vunpack.c.h.b16 %v536
    %v1328 = vunpack.c.l.b16 %v537
    %v1329 = vunpack.c.h.b16 %v537
    %v1330 = vunpack.c.l.b16 %v538
    %v1331 = vunpack.c.h.b16 %v538
    %v1332 = vunpack.c.l.b16 %v539
    %v1333 = vunpack.c.h.b16 %v539
    %v1334 = vunpack.c.l.b16 %v540
    %v1335 = vunpack.c.h.b16 %v540
    %v1336 = vunpack.c.l.b16 %v541
    %v1337 = vunpack.c.h.b16 %v541
    %v1338 = vunpack.c.l.b16 %v542
    %v1339 = vunpack.c.h.b16 %v542
    %v1340 = vunpack.c.l.b16 %v543
    %v1341 = vunpack.c.h.b16 %v543
    %v1342 = vunpack.c.l.b16 %v544
    %v1343 = vunpack.c.h.b16 %v544
    %v1344 = vunpack.c.l.b16 %v545
    %v1345 = vunpack.c.h.b16 %v545
    %v1346 = vunpack.c.l.b16 %v546
    %v1347 = vunpack.c.h.b16 %v546
    %v1348 = vunpack.c.l.b16 %v547
    %v1349 = vunpack.c.h.b16 %v547
    %v1350 = vunpack.c.l.b16 %v548
    %v1351 = vunpack.c.h.b16 %v548
    %v1352 = vunpack.c.l.b16 %v549
    %v1353 = vunpack.c.h.b16 %v549
    %v1354 = vunpack.c.l.b16 %v550
    %v1355 = vunpack.c.h.b16 %v550
    %v1356 = vunpack.c.l.b16 %v551
    %v1357 = vunpack.c.h.b16 %v551
    %v1358 = vunpack.c.l.b16 %v552
    %v1359 = vunpack.c.h.b16 %v552
    %v1360 = vunpack.c.l.b16 %v553
    %v1361 = vunpack.c.h.b16 %v553
    %v1362 = vunpack.c.l.b16 %v554
    %v1363 = vunpack.c.h.b16 %v554
    %v1364 = vunpack.c.l.b16 %v555
    %v1365 = vunpack.c.h.b16 %v555
    %v1366 = vunpack.c.l.b16 %v556
    %v1367 = vunpack.c.h.b16 %v556
    %v1368 = vunpack.c.l.b16 %v557
    %v1369 = vunpack.c.h.b16 %v557
    %v1370 = vunpack.c.l.b16 %v558
    %v1371 = vunpack.c.h.b16 %v558
    %v1372 = vunpack.c.l.b16 %v559
    %v1373 = vunpack.c.h.b16 %v559
    %v1374 = vunpack.c.l.b16 %v560
    %v1375 = vunpack.c.h.b16 %v560
    %v1376 = vunpack.c.l.b16 %v561
    %v1377 = vunpack.c.h.b16 %v561
    %v1378 = vunpack.c.l.b16 %v562
    %v1379 = vunpack.c.h.b16 %v562
    %v1380 = vunpack.c.l.b16 %v563
    %v1381 = vunpack.c.h.b16 %v563
    %v1382 = vunpack.c.l.b16 %v564
    %v1383 = vunpack.c.h.b16 %v564
    %v1384 = vunpack.c.l.b16 %v565
    %v1385 = vunpack.c.h.b16 %v565
    %v1386 = vunpack.c.l.b16 %v566
    %v1387 = vunpack.c.h.b16 %v566
    %v1388 = vunpack.c.l.b16 %v567
    %v1389 = vunpack.c.h.b16 %v567
    %v1390 = vunpack.c.l.b16 %v568
    %v1391 = vunpack.c.h.b16 %v568
    %v1392 = vunpack.c.l.b16 %v569
    %v1393 = vunpack.c.h.b16 %v569
    %v1394 = vunpack.c.l.b16 %v570
    %v1395 = vunpack.c.h.b16 %v570
    %v1396 = vunpack.c.l.b16 %v571
    %v1397 = vunpack.c.h.b16 %v571
    %v1398 = vunpack.c.l.b16 %v572
    %v1399 = vunpack.c.h.b16 %v572
    %v1400 = vunpack.c.l.b16 %v573
    %v1401 = vunpack.c.h.b16 %v573
    %v1402 = vunpack.c.l.b16 %v574
    %v1403 = vunpack.c.h.b16 %v574
    %v1404 = vunpack.c.l.b16 %v575
    %v1405 = vunpack.c.h.b16 %v575
    %v1406 = vunpack.c.l.b16 %v576
    %v1407 = vunpack.c.h.b16 %v576
    %v1408 = vunpack.c.l.b16 %v577
    %v1409 = vunpack.c.h.b16 %v577
    %v1410 = vunpack.c.l.b16 %v578
    %v1411 = vunpack.c.h.b16 %v578
    %v1412 = vunpack.c.l.b16 %v579
    %v1413 = vunpack.c.h.b16 %v579
    %v1414 = vunpack.c.l.b16 %v580
    %v1415 = vunpack.c.h.b16 %v580
    %v1416 = vunpack.c.l.b16 %v581
    %v1417 = vunpack.c.h.b16 %v581
    %v1418 = vunpack.c.l.b16 %v582
    %v1419 = vunpack.c.h.b16 %v582
    %v1420 = vunpack.c.l.b16 %v583
    %v1421 = vunpack.c.h.b16 %v583
    %v1422 = vunpack.c.l.b16 %v584
    %v1423 = vunpack.c.h.b16 %v584
    %v1424 = vunpack.c.l.b16 %v585
    %v1425 = vunpack.c.h.b16 %v585
    %v1426 = vunpack.c.l.b16 %v586
    %v1427 = vunpack.c.h.b16 %v586
    %v1428 = vunpack.c.l.b16 %v587
    %v1429 = vunpack.c.h.b16 %v587
    %v1430 = vunpack.c.l.b16 %v588
    %v1431 = vunpack.c.h.b16 %v588
    %v1432 = vunpack.c.l.b16 %v589
    %v1433 = vunpack.c.h.b16 %v589
    %v1434 = vunpack.c.l.b16 %v590
    %v1435 = vunpack.c.h.b16 %v590
    %v1436 = vunpack.c.l.b16 %v591
    %v1437 = vunpack.c.h.b16 %v591
    %v1438 = vunpack.c.l.b16 %v592
    %v1439 = vunpack.c.h.b16 %v592
    %v1440 = vunpack.c.l.b16 %v593
    %v1441 = vunpack.c.h.b16 %v593
    %v1442 = vunpack.c.l.b16 %v594
    %v1443 = vunpack.c.h.b16 %v594
    %v1444 = vunpack.c.l.b16 %v595
    %v1445 = vunpack.c.h.b16 %v595
    %v1446 = vunpack.c.l.b16 %v596
    %v1447 = vunpack.c.h.b16 %v596
    %v1448 = vunpack.c.l.b16 %v597
    %v1449 = vunpack.c.h.b16 %v597
    %v1450 = vunpack.c.l.b16 %v598
    %v1451 = vunpack.c.h.b16 %v598
    %v1452 = vunpack.c.l.b16 %v599
    %v1453 = vunpack.c.h.b16 %v599
    %v1454 = vunpack.c.l.b16 %v600
    %v1455 = vunpack.c.h.b16 %v600
    %v1456 = vunpack.c.l.b16 %v601
    %v1457 = vunpack.c.h.b16 %v601
    %v1458 = vunpack.c.l.b16 %v602
    %v1459 = vunpack.c.h.b16 %v602
    %v1460 = vunpack.c.l.b16 %v603
    %v1461 = vunpack.c.h.b16 %v603
    %v1462 = vunpack.c.l.b16 %v604
    %v1463 = vunpack.c.h.b16 %v604
    %v1464 = vunpack.c.l.b16 %v605
    %v1465 = vunpack.c.h.b16 %v605
    %v1466 = vunpack.c.l.b16 %v606
    %v1467 = vunpack.c.h.b16 %v606
    %v1468 = vunpack.c.l.b16 %v607
    %v1469 = vunpack.c.h.b16 %v607
    %v1470 = vunpack.c.l.b16 %v608
    %v1471 = vunpack.c.h.b16 %v608
    %v1472 = vunpack.c.l.b16 %v609
    %v1473 = vunpack.c.h.b16 %v609
    %v1474 = vunpack.c.l.b16 %v610
    %v1475 = vunpack.c.h.b16 %v610
    %v1476 = vunpack.c.l.b16 %v611
    %v1477 = vunpack.c.h.b16 %v611
    %v1478 = vunpack.c.l.b16 %v612
    %v1479 = vunpack.c.h.b16 %v612
    %v1480 = vunpack.c.l.b16 %v613
    %v1481 = vunpack.c.h.b16 %v613
    %v1482 = vunpack.c.l.b16 %v614
    %v1483 = vunpack.c.h.b16 %v614
    %v1484 = vunpack.c.l.b16 %v615
    %v1485 = vunpack.c.h.b16 %v615
    %v1486 = vunpack.c.l.b16 %v616
    %v1487 = vunpack.c.h.b16 %v616
    %v1488 = vunpack.c.l.b16 %v617
    %v1489 = vunpack.c.h.b16 %v617
    %v1490 = vunpack.c.l.b16 %v618
    %v1491 = vunpack.c.h.b16 %v618
    %v1492 = vunpack.c.l.b16 %v619
    %v1493 = vunpack.c.h.b16 %v619
    %v1494 = vunpack.c.l.b16 %v620
    %v1495 = vunpack.c.h.b16 %v620
    %v1496 = vunpack.c.l.b16 %v621
    %v1497 = vunpack.c.h.b16 %v621
    %v1498 = vunpack.c.l.b16 %v622
    %v1499 = vunpack.c.h.b16 %v622
    %v1500 = vunpack.c.l.b16 %v623
    %v1501 = vunpack.c.h.b16 %v623
    %v1502 = vunpack.c.l.b16 %v624
    %v1503 = vunpack.c.h.b16 %v624
    %v1504 = vunpack.c.l.b16 %v625
    %v1505 = vunpack.c.h.b16 %v625
    %v1506 = vunpack.c.l.b16 %v626
    %v1507 = vunpack.c.h.b16 %v626
    %v1508 = vunpack.c.l.b16 %v627
    %v1509 = vunpack.c.h.b16 %v627
    %v1510 = vunpack.c.l.b16 %v628
    %v1511 = vunpack.c.h.b16 %v628
    %v1512 = vunpack.c.l.b16 %v629
    %v1513 = vunpack.c.h.b16 %v629
    %v1514 = vunpack.c.l.b16 %v630
    %v1515 = vunpack.c.h.b16 %v630
    %v1516 = vunpack.c.l.b16 %v631
    %v1517 = vunpack.c.h.b16 %v631
    %v1518 = vunpack.c.l.b16 %v632
    %v1519 = vunpack.c.h.b16 %v632
    %v1520 = vunpack.c.l.b16 %v633
    %v1521 = vunpack.c.h.b16 %v633
    %v1522 = vunpack.c.l.b16 %v634
    %v1523 = vunpack.c.h.b16 %v634
    %v1524 = vunpack.c.l.b16 %v635
    %v1525 = vunpack.c.h.b16 %v635
    %v1526 = vunpack.c.l.b16 %v636
    %v1527 = vunpack.c.h.b16 %v636
    %v1528 = vunpack.c.l.b16 %v637
    %v1529 = vunpack.c.h.b16 %v637
    %v1530 = vunpack.c.l.b16 %v638
    %v1531 = vunpack.c.h.b16 %v638
    %v1532 = vunpack.c.l.b16 %v639
    %v1533 = vunpack.c.h.b16 %v639
    %v1534 = vunpack.c.l.b16 %v640
    %v1535 = vunpack.c.h.b16 %v640
    %v1536 = vunpack.c.l.b16 %v641
    %v1537 = vunpack.c.h.b16 %v641
    %v1538 = vpack.c.b16 %v968, %v962
    %v1539 = vpack.c.b16 %v969, %v963
    %v1540 = vpack.c.b16 %v970, %v964
    %v1541 = vpack.c.b16 %v971, %v965
    %v1542 = vpack.c.b16 %v972, %v966
    %v1543 = vpack.c.b16 %v973, %v967
    %v1544 = vpack.c.b16 %v980, %v974
    %v1545 = vpack.c.b16 %v981, %v975
    %v1546 = vpack.c.b16 %v982, %v976
    %v1547 = vpack.c.b16 %v983, %v977
    %v1548 = vpack.c.b16 %v984, %v978
    %v1549 = vpack.c.b16 %v985, %v979
    %v1550 = vpack.c.b16 %v992, %v986
    %v1551 = vpack.c.b16 %v993, %v987
    %v1552 = vpack.c.b16 %v994, %v988
    %v1553 = vpack.c.b16 %v995, %v989
    %v1554 = vpack.c.b16 %v996, %v990
    %v1555 = vpack.c.b16 %v997, %v991
    %v1556 = vpack.c.b16 %v1004, %v998
    %v1557 = vpack.c.b16 %v1005, %v999
    %v1558 = vpack.c.b16 %v1006, %v1000
    %v1559 = vpack.c.b16 %v1007, %v1001
    %v1560 = vpack.c.b16 %v1008, %v1002
    %v1561 = vpack.c.b16 %v1009, %v1003
    %v1562 = vpack.c.b16 %v1016, %v1010
    %v1563 = vpack.c.b16 %v1017, %v1011
    %v1564 = vpack.c.b16 %v1018, %v1012
    %v1565 = vpack.c.b16 %v1019, %v1013
    %v1566 = vpack.c.b16 %v1020, %v1014
    %v1567 = vpack.c.b16 %v1021, %v1015
    %v1568 = vpack.c.b16 %v1028, %v1022
    %v1569 = vpack.c.b16 %v1029, %v1023
    %v1570 = vpack.c.b16 %v1030, %v1024
    %v1571 = vpack.c.b16 %v1031, %v1025
    %v1572 = vpack.c.b16 %v1032, %v1026
    %v1573 = vpack.c.b16 %v1033, %v1027
    %v1574 = vpack.c.b16 %v1040, %v1034
    %v1575 = vpack.c.b16 %v1041, %v1035
    %v1576 = vpack.c.b16 %v1042, %v1036
    %v1577 = vpack.c.b16 %v1043, %v1037
    %v1578 = vpack.c.b16 %v1044, %v1038
    %v1579 = vpack.c.b16 %v1045, %v1039
    %v1580 = vpack.c.b16 %v1052, %v1046
    %v1581 = vpack.c.b16 %v1053, %v1047
    %v1582 = vpack.c.b16 %v1054, %v1048
    %v1583 = vpack.c.b16 %v1055, %v1049
    %v1584 = vpack.c.b16 %v1056, %v1050
    %v1585 = vpack.c.b16 %v1057, %v1051
    %v1586 = vpack.c.b16 %v1064, %v1058
    %v1587 = vpack.c.b16 %v1065, %v1059
    %v1588 = vpack.c.b16 %v1066, %v1060
    %v1589 = vpack.c.b16 %v1067, %v1061
    %v1590 = vpack.c.b16 %v1068, %v1062
    %v1591 = vpack.c.b16 %v1069, %v1063
    %v1592 = vpack.c.b16 %v1076, %v1070
    %v1593 = vpack.c.b16 %v1077, %v1071
    %v1594 = vpack.c.b16 %v1078, %v1072
    %v1595 = vpack.c.b16 %v1079, %v1073
    %v1596 = vpack.c.b16 %v1080, %v1074
    %v1597 = vpack.c.b16 %v1081, %v1075
    %v1598 = vpack.c.b16 %v1088, %v1082
    %v1599 = vpack.c.b16 %v1089, %v1083
    %v1600 = vpack.c.b16 %v1090, %v1084
    %v1601 = vpack.c.b16 %v1091, %v1085
    %v1602 = vpack.c.b16 %v1092, %v1086
    %v1603 = vpack.c.b16 %v1093, %v1087
    %v1604 = vpack.c.b16 %v1100, %v1094
    %v1605 = vpack.c.b16 %v1101, %v1095
    %v1606 = vpack.c.b16 %v1102, %v1096
    %v1607 = vpack.c.b16 %v1103, %v1097
    %v1608 = vpack.c.b16 %v1104, %v1098
    %v1609 = vpack.c.b16 %v1105, %v1099
    %v1610 = vpack.c.b16 %v1112, %v1106
    %v1611 = vpack.c.b16 %v1113, %v1107
    %v1612 = vpack.c.b16 %v1114, %v1108
    %v1613 = vpack.c.b16 %v1115, %v1109
    %v1614 = vpack.c.b16 %v1116, %v1110
    %v1615 = vpack.c.b16 %v1117, %v1111
    %v1616 = vpack.c.b16 %v1124, %v1118
    %v1617 = vpack.c.b16 %v1125, %v1119
    %v1618 = vpack.c.b16 %v1126, %v1120
    %v1619 = vpack.c.b16 %v1127, %v1121
    %v1620 = vpack.c.b16 %v1128, %v1122
    %v1621 = vpack.c.b16 %v1129, %v1123
    %v1622 = vpack.c.b16 %v1136, %v1130
    %v1623 = vpack.c.b16 %v1137, %v1131
    %v1624 = vpack.c.b16 %v1138, %v1132
    %v1625 = vpack.c.b16 %v1139, %v1133
    %v1626 = vpack.c.b16 %v1140, %v1134
    %v1627 = vpack.c.b16 %v1141, %v1135
    %v1628 = vpack.c.b16 %v1148, %v1142
    %v1629 = vpack.c.b16 %v1149, %v1143
    %v1630 = vpack.c.b16 %v1150, %v1144
    %v1631 = vpack.c.b16 %v1151, %v1145
    %v1632 = vpack.c.b16 %v1152, %v1146
    %v1633 = vpack.c.b16 %v1153, %v1147
    %v1634 = vpack.c.b16 %v1160, %v1154
    %v1635 = vpack.c.b16 %v1161, %v1155
    %v1636 = vpack.c.b16 %v1162, %v1156
    %v1637 = vpack.c.b16 %v1163, %v1157
    %v1638 = vpack.c.b16 %v1164, %v1158
    %v1639 = vpack.c.b16 %v1165, %v1159
    %v1640 = vpack.c.b16 %v1172, %v1166
    %v1641 = vpack.c.b16 %v1173, %v1167
    %v1642 = vpack.c.b16 %v1174, %v1168
    %v1643 = vpack.c.b16 %v1175, %v1169
    %v1644 = vpack.c.b16 %v1176, %v1170
    %v1645 = vpack.c.b16 %v1177, %v1171
    %v1646 = vpack.c.b16 %v1184, %v1178
    %v1647 = vpack.c.b16 %v1185, %v1179
    %v1648 = vpack.c.b16 %v1186, %v1180
    %v1649 = vpack.c.b16 %v1187, %v1181
    %v1650 = vpack.c.b16 %v1188, %v1182
    %v1651 = vpack.c.b16 %v1189, %v1183
    %v1652 = vpack.c.b16 %v1196, %v1190
    %v1653 = vpack.c.b16 %v1197, %v1191
    %v1654 = vpack.c.b16 %v1198, %v1192
    %v1655 = vpack.c.b16 %v1199, %v1193
    %v1656 = vpack.c.b16 %v1200, %v1194
    %v1657 = vpack.c.b16 %v1201, %v1195
    %v1658 = vpack.c.b16 %v1208, %v1202
    %v1659 = vpack.c.b16 %v1209, %v1203
    %v1660 = vpack.c.b16 %v1210, %v1204
    %v1661 = vpack.c.b16 %v1211, %v1205
    %v1662 = vpack.c.b16 %v1212, %v1206
    %v1663 = vpack.c.b16 %v1213, %v1207
    %v1664 = vpack.c.b16 %v1220, %v1214
    %v1665 = vpack.c.b16 %v1221, %v1215
    %v1666 = vpack.c.b16 %v1222, %v1216
    %v1667 = vpack.c.b16 %v1223, %v1217
    %v1668 = vpack.c.b16 %v1224, %v1218
    %v1669 = vpack.c.b16 %v1225, %v1219
    %v1670 = vpack.c.b16 %v1232, %v1226
    %v1671 = vpack.c.b16 %v1233, %v1227
    %v1672 = vpack.c.b16 %v1234, %v1228
    %v1673 = vpack.c.b16 %v1235, %v1229
    %v1674 = vpack.c.b16 %v1236, %v1230
    %v1675 = vpack.c.b16 %v1237, %v1231
    %v1676 = vpack.c.b16 %v1244, %v1238
    %v1677 = vpack.c.b16 %v1245, %v1239
    %v1678 = vpack.c.b16 %v1246, %v1240
    %v1679 = vpack.c.b16 %v1247, %v1241
    %v1680 = vpack.c.b16 %v1248, %v1242
    %v1681 = vpack.c.b16 %v1249, %v1243
    %v1682 = vpack.c.b16 %v1256, %v1250
    %v1683 = vpack.c.b16 %v1257, %v1251
    %v1684 = vpack.c.b16 %v1258, %v1252
    %v1685 = vpack.c.b16 %v1259, %v1253
    %v1686 = vpack.c.b16 %v1260, %v1254
    %v1687 = vpack.c.b16 %v1261, %v1255
    %v1688 = vpack.c.b16 %v1268, %v1262
    %v1689 = vpack.c.b16 %v1269, %v1263
    %v1690 = vpack.c.b16 %v1270, %v1264
    %v1691 = vpack.c.b16 %v1271, %v1265
    %v1692 = vpack.c.b16 %v1272, %v1266
    %v1693 = vpack.c.b16 %v1273, %v1267
    %v1694 = vpack.c.b16 %v1280, %v1274
    %v1695 = vpack.c.b16 %v1281, %v1275
    %v1696 = vpack.c.b16 %v1282, %v1276
    %v1697 = vpack.c.b16 %v1283, %v1277
    %v1698 = vpack.c.b16 %v1284, %v1278
    %v1699 = vpack.c.b16 %v1285, %v1279
    %v1700 = vpack.c.b16 %v1292, %v1286
    %v1701 = vpack.c.b16 %v1293, %v1287
    %v1702 = vpack.c.b16 %v1294, %v1288
    %v1703 = vpack.c.b16 %v1295, %v1289
    %v1704 = vpack.c.b16 %v1296, %v1290
    %v1705 = vpack.c.b16 %v1297, %v1291
    %v1706 = vpack.c.b16 %v1304, %v1298
    %v1707 = vpack.c.b16 %v1305, %v1299
    %v1708 = vpack.c.b16 %v1306, %v1300
    %v1709 = vpack.c.b16 %v1307, %v1301
    %v1710 = vpack.c.b16 %v1308, %v1302
    %v1711 = vpack.c.b16 %v1309, %v1303
    %v1712 = vpack.c.b16 %v1316, %v1310
    %v1713 = vpack.c.b16 %v1317, %v1311
    %v1714 = vpack.c.b16 %v1318, %v1312
    %v1715 = vpack.c.b16 %v1319, %v1313
    %v1716 = vpack.c.b16 %v1320, %v1314
    %v1717 = vpack.c.b16 %v1321, %v1315
    %v1718 = vpack.c.b16 %v1328, %v1322
    %v1719 = vpack.c.b16 %v1329, %v1323
    %v1720 = vpack.c.b16 %v1330, %v1324
    %v1721 = vpack.c.b16 %v1331, %v1325
    %v1722 = vpack.c.b16 %v1332, %v1326
    %v1723 = vpack.c.b16 %v1333, %v1327
    %v1724 = vpack.c.b16 %v1340, %v1334
    %v1725 = vpack.c.b16 %v1341, %v1335
    %v1726 = vpack.c.b16 %v1342, %v1336
    %v1727 = vpack.c.b16 %v1343, %v1337
    %v1728 = vpack.c.b16 %v1344, %v1338
    %v1729 = vpack.c.b16 %v1345, %v1339
    %v1730 = vpack.c.b16 %v1352, %v1346
    %v1731 = vpack.c.b16 %v1353, %v1347
    %v1732 = vpack.c.b16 %v1354, %v1348
    %v1733 = vpack.c.b16 %v1355, %v1349
    %v1734 = vpack.c.b16 %v1356, %v1350
    %v1735 = vpack.c.b16 %v1357, %v1351
    %v1736 = vpack.c.b16 %v1364, %v1358
    %v1737 = vpack.c.b16 %v1365, %v1359
    %v1738 = vpack.c.b16 %v1366, %v1360
    %v1739 = vpack.c.b16 %v1367, %v1361
    %v1740 = vpack.c.b16 %v1368, %v1362
    %v1741 = vpack.c.b16 %v1369, %v1363
    %v1742 = vpack.c.b16 %v1376, %v1370
    %v1743 = vpack.c.b16 %v1377, %v1371
    %v1744 = vpack.c.b16 %v1378, %v1372
    %v1745 = vpack.c.b16 %v1379, %v1373
    %v1746 = vpack.c.b16 %v1380, %v1374
    %v1747 = vpack.c.b16 %v1381, %v1375
    %v1748 = vpack.c.b16 %v1388, %v1382
    %v1749 = vpack.c.b16 %v1389, %v1383
    %v1750 = vpack.c.b16 %v1390, %v1384
    %v1751 = vpack.c.b16 %v1391, %v1385
    %v1752 = vpack.c.b16 %v1392, %v1386
    %v1753 = vpack.c.b16 %v1393, %v1387
    %v1754 = vpack.c.b16 %v1400, %v1394
    %v1755 = vpack.c.b16 %v1401, %v1395
    %v1756 = vpack.c.b16 %v1402, %v1396
    %v1757 = vpack.c.b16 %v1403, %v1397
    %v1758 = vpack.c.b16 %v1404, %v1398
    %v1759 = vpack.c.b16 %v1405, %v1399
    %v1760 = vpack.c.b16 %v1412, %v1406
    %v1761 = vpack.c.b16 %v1413, %v1407
    %v1762 = vpack.c.b16 %v1414, %v1408
    %v1763 = vpack.c.b16 %v1415, %v1409
    %v1764 = vpack.c.b16 %v1416, %v1410
    %v1765 = vpack.c.b16 %v1417, %v1411
    %v1766 = vpack.c.b16 %v1424, %v1418
    %v1767 = vpack.c.b16 %v1425, %v1419
    %v1768 = vpack.c.b16 %v1426, %v1420
    %v1769 = vpack.c.b16 %v1427, %v1421
    %v1770 = vpack.c.b16 %v1428, %v1422
    %v1771 = vpack.c.b16 %v1429, %v1423
    %v1772 = vpack.c.b16 %v1436, %v1430
    %v1773 = vpack.c.b16 %v1437, %v1431
    %v1774 = vpack.c.b16 %v1438, %v1432
    %v1775 = vpack.c.b16 %v1439, %v1433
    %v1776 = vpack.c.b16 %v1440, %v1434
    %v1777 = vpack.c.b16 %v1441, %v1435
    %v1778 = vpack.c.b16 %v1448, %v1442
    %v1779 = vpack.c.b16 %v1449, %v1443
    %v1780 = vpack.c.b16 %v1450, %v1444
    %v1781 = vpack.c.b16 %v1451, %v1445
    %v1782 = vpack.c.b16 %v1452, %v1446
    %v1783 = vpack.c.b16 %v1453, %v1447
    %v1784 = vpack.c.b16 %v1460, %v1454
    %v1785 = vpack.c.b16 %v1461, %v1455
    %v1786 = vpack.c.b16 %v1462, %v1456
    %v1787 = vpack.c.b16 %v1463, %v1457
    %v1788 = vpack.c.b16 %v1464, %v1458
    %v1789 = vpack.c.b16 %v1465, %v1459
    %v1790 = vpack.c.b16 %v1472, %v1466
    %v1791 = vpack.c.b16 %v1473, %v1467
    %v1792 = vpack.c.b16 %v1474, %v1468
    %v1793 = vpack.c.b16 %v1475, %v1469
    %v1794 = vpack.c.b16 %v1476, %v1470
    %v1795 = vpack.c.b16 %v1477, %v1471
    %v1796 = vpack.c.b16 %v1484, %v1478
    %v1797 = vpack.c.b16 %v1485, %v1479
    %v1798 = vpack.c.b16 %v1486, %v1480
    %v1799 = vpack.c.b16 %v1487, %v1481
    %v1800 = vpack.c.b16 %v1488, %v1482
    %v1801 = vpack.c.b16 %v1489, %v1483
    %v1802 = vpack.c.b16 %v1496, %v1490
    %v1803 = vpack.c.b16 %v1497, %v1491
    %v1804 = vpack.c.b16 %v1498, %v1492
    %v1805 = vpack.c.b16 %v1499, %v1493
    %v1806 = vpack.c.b16 %v1500, %v1494
    %v1807 = vpack.c.b16 %v1501, %v1495
    %v1808 = vpack.c.b16 %v1508, %v1502
    %v1809 = vpack.c.b16 %v1509, %v1503
    %v1810 = vpack.c.b16 %v1510, %v1504
    %v1811 = vpack.c.b16 %v1511, %v1505
    %v1812 = vpack.c.b16 %v1512, %v1506
    %v1813 = vpack.c.b16 %v1513, %v1507
    %v1814 = vpack.c.b16 %v1520, %v1514
    %v1815 = vpack.c.b16 %v1521, %v1515
    %v1816 = vpack.c.b16 %v1522, %v1516
    %v1817 = vpack.c.b16 %v1523, %v1517
    %v1818 = vpack.c.b16 %v1524, %v1518
    %v1819 = vpack.c.b16 %v1525, %v1519
    %v1820 = vpack.c.b16 %v1532, %v1526
    %v1821 = vpack.c.b16 %v1533, %v1527
    %v1822 = vpack.c.b16 %v1534, %v1528
    %v1823 = vpack.c.b16 %v1535, %v1529
    %v1824 = vpack.c.b16 %v1536, %v1530
    %v1825 = vpack.c.b16 %v1537, %v1531
    %2114 = vmatprep.subr.bf16.mxu0 %v1539
    %2115 = vmatpush1.bf16.msra.mxu0 %v1538
    %2116 = vmatprep.subr.bf16.mxu0 %v1545
    %2117 = vmatpush1.bf16.msra.mxu0 %v1544
    %2118 = vmatprep.subr.bf16.mxu0 %v1551
    %2119 = vmatpush1.bf16.msra.mxu0 %v1550
    %2120 = vmatprep.subr.bf16.mxu0 %v1557
    %2121 = vmatpush1.bf16.msra.mxu0 %v1556
    %2122 = vmatprep.subr.bf16.mxu0 %v1563
    %2123 = vmatpush1.bf16.msra.mxu0 %v1562
    %2124 = vmatprep.subr.bf16.mxu0 %v1569
    %2125 = vmatpush1.bf16.msra.mxu0 %v1568
    %2126 = vmatprep.subr.bf16.mxu0 %v1575
    %2127 = vmatpush1.bf16.msra.mxu0 %v1574
    %2128 = vmatprep.subr.bf16.mxu0 %v1581
    %2129 = vmatpush1.bf16.msra.mxu0 %v1580
    %2130 = vmatprep.subr.bf16.mxu0 %v1587
    %2131 = vmatpush1.bf16.msra.mxu0 %v1586
    %2132 = vmatprep.subr.bf16.mxu0 %v1593
    %2133 = vmatpush1.bf16.msra.mxu0 %v1592
    %2134 = vmatprep.subr.bf16.mxu0 %v1599
    %2135 = vmatpush1.bf16.msra.mxu0 %v1598
    %2136 = vmatprep.subr.bf16.mxu0 %v1605
    %2137 = vmatpush1.bf16.msra.mxu0 %v1604
    %2138 = vmatprep.subr.bf16.mxu0 %v1611
    %2139 = vmatpush1.bf16.msra.mxu0 %v1610
    %2140 = vmatprep.subr.bf16.mxu0 %v1617
    %2141 = vmatpush1.bf16.msra.mxu0 %v1616
    %2142 = vmatprep.subr.bf16.mxu0 %v1623
    %2143 = vmatpush1.bf16.msra.mxu0 %v1622
    %2144 = vmatprep.subr.bf16.mxu0 %v1629
    %2145 = vmatpush1.bf16.msra.mxu0 %v1628
    %2146 = vmatprep.mubr.bf16.mxu0 %v349
    %2147 = vmatmul.mubr.bf16.gmra.mrb[0].mxu0 %v348
    %v2148 = vpop.f32.mrb[0].mxu0
    %v2149 = vadd.f32 %v647, %v2148
    %v2150 = vpop.f32.mrb[0].mxu0
    %v2151 = vadd.f32 %v651, %v2150
    %v2152 = vpop.f32.mrb[0].mxu0
    %v2153 = vpop.f32.mrb[0].mxu0
    %2154 = vdwg.mxu0
    %2155 = vmatprep.subr.bf16.mxu0 %v1635
    %2156 = vmatpush1.bf16.msra.mxu0 %v1634
    %2157 = vmatprep.subr.bf16.mxu0 %v1641
    %2158 = vmatpush1.bf16.msra.mxu0 %v1640
    %2159 = vmatprep.subr.bf16.mxu0 %v1647
    %2160 = vmatpush1.bf16.msra.mxu0 %v1646
    %2161 = vmatprep.subr.bf16.mxu0 %v1653
    %2162 = vmatpush1.bf16.msra.mxu0 %v1652
    %2163 = vmatprep.subr.bf16.mxu0 %v1659
    %2164 = vmatpush1.bf16.msra.mxu0 %v1658
    %2165 = vmatprep.subr.bf16.mxu0 %v1665
    %2166 = vmatpush1.bf16.msra.mxu0 %v1664
    %2167 = vmatprep.subr.bf16.mxu0 %v1671
    %2168 = vmatpush1.bf16.msra.mxu0 %v1670
    %2169 = vmatprep.subr.bf16.mxu0 %v1677
    %2170 = vmatpush1.bf16.msra.mxu0 %v1676
    %2171 = vmatprep.subr.bf16.mxu0 %v1683
    %2172 = vmatpush1.bf16.msra.mxu0 %v1682
    %2173 = vmatprep.subr.bf16.mxu0 %v1689
    %2174 = vmatpush1.bf16.msra.mxu0 %v1688
    %2175 = vmatprep.subr.bf16.mxu0 %v1695
    %2176 = vmatpush1.bf16.msra.mxu0 %v1694
    %2177 = vmatprep.subr.bf16.mxu0 %v1701
    %2178 = vmatpush1.bf16.msra.mxu0 %v1700
    %2179 = vmatprep.subr.bf16.mxu0 %v1707
    %2180 = vmatpush1.bf16.msra.mxu0 %v1706
    %2181 = vmatprep.subr.bf16.mxu0 %v1713
    %2182 = vmatpush1.bf16.msra.mxu0 %v1712
    %2183 = vmatprep.subr.bf16.mxu0 %v1719
    %2184 = vmatpush1.bf16.msra.mxu0 %v1718
    %2185 = vmatprep.subr.bf16.mxu0 %v1725
    %2186 = vmatpush1.bf16.msra.mxu0 %v1724
    %2187 = vmatprep.mubr.bf16.mxu0 %v351
    %2188 = vmatmul.mubr.bf16.gmra.mrb[0].mxu0 %v350
    %v2189 = vpop.f32.mrb[0].mxu0
    %v2190 = vadd.f32 %v2149, %v2189
    %v2191 = vpop.f32.mrb[0].mxu0
    %v2192 = vadd.f32 %v2151, %v2191
    %v2193 = vpop.f32.mrb[0].mxu0
    %v2194 = vpop.f32.mrb[0].mxu0
    %2195 = vdwg.mxu0
    %2196 = vmatprep.subr.bf16.mxu0 %v1731
    %2197 = vmatpush1.bf16.msra.mxu0 %v1730
    %2198 = vmatprep.subr.bf16.mxu0 %v1737
    %2199 = vmatpush1.bf16.msra.mxu0 %v1736
    %2200 = vmatprep.subr.bf16.mxu0 %v1743
    %2201 = vmatpush1.bf16.msra.mxu0 %v1742
    %2202 = vmatprep.subr.bf16.mxu0 %v1749
    %2203 = vmatpush1.bf16.msra.mxu0 %v1748
    %2204 = vmatprep.subr.bf16.mxu0 %v1755
    %2205 = vmatpush1.bf16.msra.mxu0 %v1754
    %2206 = vmatprep.subr.bf16.mxu0 %v1761
    %2207 = vmatpush1.bf16.msra.mxu0 %v1760
    %2208 = vmatprep.subr.bf16.mxu0 %v1767
    %2209 = vmatpush1.bf16.msra.mxu0 %v1766
    %2210 = vmatprep.subr.bf16.mxu0 %v1773
    %2211 = vmatpush1.bf16.msra.mxu0 %v1772
    %2212 = vmatprep.subr.bf16.mxu0 %v1779
    %2213 = vmatpush1.bf16.msra.mxu0 %v1778
    %2214 = vmatprep.subr.bf16.mxu0 %v1785
    %2215 = vmatpush1.bf16.msra.mxu0 %v1784
    %2216 = vmatprep.subr.bf16.mxu0 %v1791
    %2217 = vmatpush1.bf16.msra.mxu0 %v1790
    %2218 = vmatprep.subr.bf16.mxu0 %v1797
    %2219 = vmatpush1.bf16.msra.mxu0 %v1796
    %2220 = vmatprep.subr.bf16.mxu0 %v1803
    %2221 = vmatpush1.bf16.msra.mxu0 %v1802
    %2222 = vmatprep.subr.bf16.mxu0 %v1809
    %2223 = vmatpush1.bf16.msra.mxu0 %v1808
    %2224 = vmatprep.subr.bf16.mxu0 %v1815
    %2225 = vmatpush1.bf16.msra.mxu0 %v1814
    %2226 = vmatprep.subr.bf16.mxu0 %v1821
    %2227 = vmatpush1.bf16.msra.mxu0 %v1820
    %2228 = vmatprep.mubr.bf16.mxu0 %v353
    %2229 = vmatmul.mubr.bf16.gmra.mrb[0].mxu0 %v352
    %v2230 = vpop.f32.mrb[0].mxu0
    %v2231 = vadd.f32 %v2190, %v2230
    %v2232 = vpop.f32.mrb[0].mxu0
    %v2233 = vadd.f32 %v2192, %v2232
    %v2234 = vpop.f32.mrb[0].mxu0
    %v2235 = vpop.f32.mrb[0].mxu0
    %2236 = vdwg.mxu0
    %2237 = vmatprep.subr.bf16.mxu0 %v1541
    %2238 = vmatpush1.bf16.msra.mxu0 %v1540
    %2239 = vmatprep.subr.bf16.mxu0 %v1547
    %2240 = vmatpush1.bf16.msra.mxu0 %v1546
    %2241 = vmatprep.subr.bf16.mxu0 %v1553
    %2242 = vmatpush1.bf16.msra.mxu0 %v1552
    %2243 = vmatprep.subr.bf16.mxu0 %v1559
    %2244 = vmatpush1.bf16.msra.mxu0 %v1558
    %2245 = vmatprep.subr.bf16.mxu0 %v1565
    %2246 = vmatpush1.bf16.msra.mxu0 %v1564
    %2247 = vmatprep.subr.bf16.mxu0 %v1571
    %2248 = vmatpush1.bf16.msra.mxu0 %v1570
    %2249 = vmatprep.subr.bf16.mxu0 %v1577
    %2250 = vmatpush1.bf16.msra.mxu0 %v1576
    %2251 = vmatprep.subr.bf16.mxu0 %v1583
    %2252 = vmatpush1.bf16.msra.mxu0 %v1582
    %2253 = vmatprep.subr.bf16.mxu0 %v1589
    %2254 = vmatpush1.bf16.msra.mxu0 %v1588
    %2255 = vmatprep.subr.bf16.mxu0 %v1595
    %2256 = vmatpush1.bf16.msra.mxu0 %v1594
    %2257 = vmatprep.subr.bf16.mxu0 %v1601
    %2258 = vmatpush1.bf16.msra.mxu0 %v1600
    %2259 = vmatprep.subr.bf16.mxu0 %v1607
    %2260 = vmatpush1.bf16.msra.mxu0 %v1606
    %2261 = vmatprep.subr.bf16.mxu0 %v1613
    %2262 = vmatpush1.bf16.msra.mxu0 %v1612
    %2263 = vmatprep.subr.bf16.mxu0 %v1619
    %2264 = vmatpush1.bf16.msra.mxu0 %v1618
    %2265 = vmatprep.subr.bf16.mxu0 %v1625
    %2266 = vmatpush1.bf16.msra.mxu0 %v1624
    %2267 = vmatprep.subr.bf16.mxu0 %v1631
    %2268 = vmatpush1.bf16.msra.mxu0 %v1630
    %2269 = vmatprep.mubr.bf16.mxu0 %v349
    %2270 = vmatmul.mubr.bf16.gmra.mrb[0].mxu0 %v348
    %v2271 = vpop.f32.mrb[0].mxu0
    %v2272 = vadd.f32 %v655, %v2271
    %v2273 = vpop.f32.mrb[0].mxu0
    %v2274 = vadd.f32 %v659, %v2273
    %v2275 = vpop.f32.mrb[0].mxu0
    %v2276 = vpop.f32.mrb[0].mxu0
    %2277 = vdwg.mxu0
    %2278 = vmatprep.subr.bf16.mxu0 %v1637
    %2279 = vmatpush1.bf16.msra.mxu0 %v1636
    %2280 = vmatprep.subr.bf16.mxu0 %v1643
    %2281 = vmatpush1.bf16.msra.mxu0 %v1642
    %2282 = vmatprep.subr.bf16.mxu0 %v1649
    %2283 = vmatpush1.bf16.msra.mxu0 %v1648
    %2284 = vmatprep.subr.bf16.mxu0 %v1655
    %2285 = vmatpush1.bf16.msra.mxu0 %v1654
    %2286 = vmatprep.subr.bf16.mxu0 %v1661
    %2287 = vmatpush1.bf16.msra.mxu0 %v1660
    %2288 = vmatprep.subr.bf16.mxu0 %v1667
    %2289 = vmatpush1.bf16.msra.mxu0 %v1666
    %2290 = vmatprep.subr.bf16.mxu0 %v1673
    %2291 = vmatpush1.bf16.msra.mxu0 %v1672
    %2292 = vmatprep.subr.bf16.mxu0 %v1679
    %2293 = vmatpush1.bf16.msra.mxu0 %v1678
    %2294 = vmatprep.subr.bf16.mxu0 %v1685
    %2295 = vmatpush1.bf16.msra.mxu0 %v1684
    %2296 = vmatprep.subr.bf16.mxu0 %v1691
    %2297 = vmatpush1.bf16.msra.mxu0 %v1690
    %2298 = vmatprep.subr.bf16.mxu0 %v1697
    %2299 = vmatpush1.bf16.msra.mxu0 %v1696
    %2300 = vmatprep.subr.bf16.mxu0 %v1703
    %2301 = vmatpush1.bf16.msra.mxu0 %v1702
    %2302 = vmatprep.subr.bf16.mxu0 %v1709
    %2303 = vmatpush1.bf16.msra.mxu0 %v1708
    %2304 = vmatprep.subr.bf16.mxu0 %v1715
    %2305 = vmatpush1.bf16.msra.mxu0 %v1714
    %2306 = vmatprep.subr.bf16.mxu0 %v1721
    %2307 = vmatpush1.bf16.msra.mxu0 %v1720
    %2308 = vmatprep.subr.bf16.mxu0 %v1727
    %2309 = vmatpush1.bf16.msra.mxu0 %v1726
    %2310 = vmatprep.mubr.bf16.mxu0 %v351
    %2311 = vmatmul.mubr.bf16.gmra.mrb[0].mxu0 %v350
    %v2312 = vpop.f32.mrb[0].mxu0
    %v2313 = vadd.f32 %v2272, %v2312
    %v2314 = vpop.f32.mrb[0].mxu0
    %v2315 = vadd.f32 %v2274, %v2314
    %v2316 = vpop.f32.mrb[0].mxu0
    %v2317 = vpop.f32.mrb[0].mxu0
    %2318 = vdwg.mxu0
    %2319 = vmatprep.subr.bf16.mxu0 %v1733
    %2320 = vmatpush1.bf16.msra.mxu0 %v1732
    %2321 = vmatprep.subr.bf16.mxu0 %v1739
    %2322 = vmatpush1.bf16.msra.mxu0 %v1738
    %2323 = vmatprep.subr.bf16.mxu0 %v1745
    %2324 = vmatpush1.bf16.msra.mxu0 %v1744
    %2325 = vmatprep.subr.bf16.mxu0 %v1751
    %2326 = vmatpush1.bf16.msra.mxu0 %v1750
    %2327 = vmatprep.subr.bf16.mxu0 %v1757
    %2328 = vmatpush1.bf16.msra.mxu0 %v1756
    %2329 = vmatprep.subr.bf16.mxu0 %v1763
    %2330 = vmatpush1.bf16.msra.mxu0 %v1762
    %2331 = vmatprep.subr.bf16.mxu0 %v1769
    %2332 = vmatpush1.bf16.msra.mxu0 %v1768
    %2333 = vmatprep.subr.bf16.mxu0 %v1775
    %2334 = vmatpush1.bf16.msra.mxu0 %v1774
    %2335 = vmatprep.subr.bf16.mxu0 %v1781
    %2336 = vmatpush1.bf16.msra.mxu0 %v1780
    %2337 = vmatprep.subr.bf16.mxu0 %v1787
    %2338 = vmatpush1.bf16.msra.mxu0 %v1786
    %2339 = vmatprep.subr.bf16.mxu0 %v1793
    %2340 = vmatpush1.bf16.msra.mxu0 %v1792
    %2341 = vmatprep.subr.bf16.mxu0 %v1799
    %2342 = vmatpush1.bf16.msra.mxu0 %v1798
    %2343 = vmatprep.subr.bf16.mxu0 %v1805
    %2344 = vmatpush1.bf16.msra.mxu0 %v1804
    %2345 = vmatprep.subr.bf16.mxu0 %v1811
    %2346 = vmatpush1.bf16.msra.mxu0 %v1810
    %2347 = vmatprep.subr.bf16.mxu0 %v1817
    %2348 = vmatpush1.bf16.msra.mxu0 %v1816
    %2349 = vmatprep.subr.bf16.mxu0 %v1823
    %2350 = vmatpush1.bf16.msra.mxu0 %v1822
    %2351 = vmatprep.mubr.bf16.mxu0 %v353
    %2352 = vmatmul.mubr.bf16.gmra.mrb[0].mxu0 %v352
    %v2353 = vpop.f32.mrb[0].mxu0
    %v2354 = vadd.f32 %v2313, %v2353
    %v2355 = vpop.f32.mrb[0].mxu0
    %v2356 = vadd.f32 %v2315, %v2355
    %v2357 = vpop.f32.mrb[0].mxu0
    %v2358 = vpop.f32.mrb[0].mxu0
    %2359 = vdwg.mxu0
    %2360 = vmatprep.subr.bf16.mxu0 %v1543
    %2361 = vmatpush1.bf16.msra.mxu0 %v1542
    %2362 = vmatprep.subr.bf16.mxu0 %v1549
    %2363 = vmatpush1.bf16.msra.mxu0 %v1548
    %2364 = vmatprep.subr.bf16.mxu0 %v1555
    %2365 = vmatpush1.bf16.msra.mxu0 %v1554
    %2366 = vmatprep.subr.bf16.mxu0 %v1561
    %2367 = vmatpush1.bf16.msra.mxu0 %v1560
    %2368 = vmatprep.subr.bf16.mxu0 %v1567
    %2369 = vmatpush1.bf16.msra.mxu0 %v1566
    %2370 = vmatprep.subr.bf16.mxu0 %v1573
    %2371 = vmatpush1.bf16.msra.mxu0 %v1572
    %2372 = vmatprep.subr.bf16.mxu0 %v1579
    %2373 = vmatpush1.bf16.msra.mxu0 %v1578
    %2374 = vmatprep.subr.bf16.mxu0 %v1585
    %2375 = vmatpush1.bf16.msra.mxu0 %v1584
    %2376 = vmatprep.subr.bf16.mxu0 %v1591
    %2377 = vmatpush1.bf16.msra.mxu0 %v1590
    %2378 = vmatprep.subr.bf16.mxu0 %v1597
    %2379 = vmatpush1.bf16.msra.mxu0 %v1596
    %2380 = vmatprep.subr.bf16.mxu0 %v1603
    %2381 = vmatpush1.bf16.msra.mxu0 %v1602
    %2382 = vmatprep.subr.bf16.mxu0 %v1609
    %2383 = vmatpush1.bf16.msra.mxu0 %v1608
    %2384 = vmatprep.subr.bf16.mxu0 %v1615
    %2385 = vmatpush1.bf16.msra.mxu0 %v1614
    %2386 = vmatprep.subr.bf16.mxu0 %v1621
    %2387 = vmatpush1.bf16.msra.mxu0 %v1620
    %2388 = vmatprep.subr.bf16.mxu0 %v1627
    %2389 = vmatpush1.bf16.msra.mxu0 %v1626
    %2390 = vmatprep.subr.bf16.mxu0 %v1633
    %2391 = vmatpush1.bf16.msra.mxu0 %v1632
    %2392 = vmatprep.mubr.bf16.mxu0 %v349
    %2393 = vmatmul.mubr.bf16.gmra.mrb[0].mxu0 %v348
    %v2394 = vpop.f32.mrb[0].mxu0
    %v2395 = vadd.f32 %v663, %v2394
    %v2396 = vpop.f32.mrb[0].mxu0
    %v2397 = vadd.f32 %v667, %v2396
    %v2398 = vpop.f32.mrb[0].mxu0
    %v2399 = vpop.f32.mrb[0].mxu0
    %2400 = vdwg.mxu0
    %2401 = vmatprep.subr.bf16.mxu0 %v1639
    %2402 = vmatpush1.bf16.msra.mxu0 %v1638
    %2403 = vmatprep.subr.bf16.mxu0 %v1645
    %2404 = vmatpush1.bf16.msra.mxu0 %v1644
    %2405 = vmatprep.subr.bf16.mxu0 %v1651
    %2406 = vmatpush1.bf16.msra.mxu0 %v1650
    %2407 = vmatprep.subr.bf16.mxu0 %v1657
    %2408 = vmatpush1.bf16.msra.mxu0 %v1656
    %2409 = vmatprep.subr.bf16.mxu0 %v1663
    %2410 = vmatpush1.bf16.msra.mxu0 %v1662
    %2411 = vmatprep.subr.bf16.mxu0 %v1669
    %2412 = vmatpush1.bf16.msra.mxu0 %v1668
    %2413 = vmatprep.subr.bf16.mxu0 %v1675
    %2414 = vmatpush1.bf16.msra.mxu0 %v1674
    %2415 = vmatprep.subr.bf16.mxu0 %v1681
    %2416 = vmatpush1.bf16.msra.mxu0 %v1680
    %2417 = vmatprep.subr.bf16.mxu0 %v1687
    %2418 = vmatpush1.bf16.msra.mxu0 %v1686
    %2419 = vmatprep.subr.bf16.mxu0 %v1693
    %2420 = vmatpush1.bf16.msra.mxu0 %v1692
    %2421 = vmatprep.subr.bf16.mxu0 %v1699
    %2422 = vmatpush1.bf16.msra.mxu0 %v1698
    %2423 = vmatprep.subr.bf16.mxu0 %v1705
    %2424 = vmatpush1.bf16.msra.mxu0 %v1704
    %2425 = vmatprep.subr.bf16.mxu0 %v1711
    %2426 = vmatpush1.bf16.msra.mxu0 %v1710
    %2427 = vmatprep.subr.bf16.mxu0 %v1717
    %2428 = vmatpush1.bf16.msra.mxu0 %v1716
    %2429 = vmatprep.subr.bf16.mxu0 %v1723
    %2430 = vmatpush1.bf16.msra.mxu0 %v1722
    %2431 = vmatprep.subr.bf16.mxu0 %v1729
    %2432 = vmatpush1.bf16.msra.mxu0 %v1728
    %2433 = vmatprep.mubr.bf16.mxu0 %v351
    %2434 = vmatmul.mubr.bf16.gmra.mrb[0].mxu0 %v350
    %v2435 = vpop.f32.mrb[0].mxu0
    %v2436 = vadd.f32 %v2395, %v2435
    %v2437 = vpop.f32.mrb[0].mxu0
    %v2438 = vadd.f32 %v2397, %v2437
    %v2439 = vpop.f32.mrb[0].mxu0
    %v2440 = vpop.f32.mrb[0].mxu0
    %2441 = vdwg.mxu0
    %2442 = vmatprep.subr.bf16.mxu0 %v1735
    %2443 = vmatpush1.bf16.msra.mxu0 %v1734
    %2444 = vmatprep.subr.bf16.mxu0 %v1741
    %2445 = vmatpush1.bf16.msra.mxu0 %v1740
    %2446 = vmatprep.subr.bf16.mxu0 %v1747
    %2447 = vmatpush1.bf16.msra.mxu0 %v1746
    %2448 = vmatprep.subr.bf16.mxu0 %v1753
    %2449 = vmatpush1.bf16.msra.mxu0 %v1752
    %2450 = vmatprep.subr.bf16.mxu0 %v1759
    %2451 = vmatpush1.bf16.msra.mxu0 %v1758
    %2452 = vmatprep.subr.bf16.mxu0 %v1765
    %2453 = vmatpush1.bf16.msra.mxu0 %v1764
    %2454 = vmatprep.subr.bf16.mxu0 %v1771
    %2455 = vmatpush1.bf16.msra.mxu0 %v1770
    %2456 = vmatprep.subr.bf16.mxu0 %v1777
    %2457 = vmatpush1.bf16.msra.mxu0 %v1776
    %2458 = vmatprep.subr.bf16.mxu0 %v1783
    %2459 = vmatpush1.bf16.msra.mxu0 %v1782
    %2460 = vmatprep.subr.bf16.mxu0 %v1789
    %2461 = vmatpush1.bf16.msra.mxu0 %v1788
    %2462 = vmatprep.subr.bf16.mxu0 %v1795
    %2463 = vmatpush1.bf16.msra.mxu0 %v1794
    %2464 = vmatprep.subr.bf16.mxu0 %v1801
    %2465 = vmatpush1.bf16.msra.mxu0 %v1800
    %2466 = vmatprep.subr.bf16.mxu0 %v1807
    %2467 = vmatpush1.bf16.msra.mxu0 %v1806
    %2468 = vmatprep.subr.bf16.mxu0 %v1813
    %2469 = vmatpush1.bf16.msra.mxu0 %v1812
    %2470 = vmatprep.subr.bf16.mxu0 %v1819
    %2471 = vmatpush1.bf16.msra.mxu0 %v1818
    %2472 = vmatprep.subr.bf16.mxu0 %v1825
    %2473 = vmatpush1.bf16.msra.mxu0 %v1824
    %2474 = vmatprep.mubr.bf16.mxu0 %v353
    %2475 = vmatmul.mubr.bf16.gmra.mrb[0].mxu0 %v352
    %v2476 = vpop.f32.mrb[0].mxu0
    %v2477 = vadd.f32 %v2436, %v2476
    %v2478 = vpop.f32.mrb[0].mxu0
    %v2479 = vadd.f32 %v2438, %v2478
    %v2480 = vpop.f32.mrb[0].mxu0
    %v2481 = vpop.f32.mrb[0].mxu0
    %2482 = vdwg.mxu0
    %v2483 = vmul.f32 %v2231, 0.01
    %v2484 = vmul.f32 %v2233, 0.01
    %v2485 = vmul.f32 %v2354, 0.01
    %v2486 = vmul.f32 %v2356, 0.01
    %v2487 = vmul.f32 %v2477, 0.01
    %v2488 = vmul.f32 %v2479, 0.01
    %v2489 = vmax.f32 %v2231, %v2483
    %v2490 = vmax.f32 %v2233, %v2484
    %v2491 = vmax.f32 %v2354, %v2485
    %v2492 = vmax.f32 %v2356, %v2486
    %v2493 = vmax.f32 %v2477, %v2487
    %v2494 = vmax.f32 %v2479, %v2488
    %v2495 = vld [vmem:[#allocation11] sm:$0x3f]
    %v2497 = vlaneseq
    %v2498 = vshrl.u32 %v2497, 7
    %v2499 = vsub.s32 0, %v2498
    %v2500 = vrot.slane %v2495, %v2499
    %v2501 = vlaneseq
    %v2502 = vshrl.u32 %v2501, 7
    %v2503 = vsub.s32 1, %v2502
    %v2504 = vrot.slane %v2495, %v2503
    %v2505 = vlaneseq
    %v2506 = vshrl.u32 %v2505, 7
    %v2507 = vsub.s32 2, %v2506
    %v2508 = vrot.slane %v2495, %v2507
    %v2509 = vlaneseq
    %v2510 = vshrl.u32 %v2509, 7
    %v2511 = vsub.s32 3, %v2510
    %v2512 = vrot.slane %v2495, %v2511
    %v2513 = vlaneseq
    %v2514 = vshrl.u32 %v2513, 7
    %v2515 = vsub.s32 4, %v2514
    %v2516 = vrot.slane %v2495, %v2515
    %v2517 = vlaneseq
    %v2518 = vshrl.u32 %v2517, 7
    %v2519 = vsub.s32 5, %v2518
    %v2520 = vrot.slane %v2495, %v2519
    %v2527 = vmul.f32 %v2489, %v2500
    %v2528 = vmul.f32 %v2490, %v2504
    %v2529 = vmul.f32 %v2491, %v2508
    %v2530 = vmul.f32 %v2492, %v2512
    %v2531 = vmul.f32 %v2493, %v2516
    %v2532 = vmul.f32 %v2494, %v2520
    %v2533 = vadd.f32 %v2527, %v2528
    %v2534 = vadd.f32 %v2533, %v2529
    %v2535 = vadd.f32 %v2534, %v2530
    %v2536 = vadd.f32 %v2535, %v2531
    %v2537 = vadd.f32 %v2536, %v2532
    %2538 = vadd.xlane.f32.xlu0 %v2537
    %v2539 = vpop.xlane.xlu0 %2538
    %v2540 = vld [vmem:[#allocation2] sm:$0x1]
    %v2542 = vlaneseq
    %v2543 = vshrl.u32 %v2542, 7
    %v2544 = vsub.s32 0, %v2543
    %v2545 = vrot.slane %v2540, %v2544
    %v2547 = vadd.f32 %v2539, %v2545
    %v2548 = vmul.f32 %v2547, 0.01
    %v2549 = vmax.f32 %v2547, %v2548
    %vm2550 = vcmask 7168
    %2551 = vst.msk [vmem:[%s7] sm:$0xff] %vm2550, %v2549
    // Predicated region
    $region54: #{tpu_custom_call.1} parent=1 // pred_check
      _
    $region55: #{tpu_custom_call.1} parent=1 // pred_check_branch
      %2553 = sbr.rel (0) target = $region57
    $region56: #{tpu_custom_call.1} parent=1 // pred_region
      _
    $region57: #{tpu_custom_call.1} parent=1 // pred_fallthru
      _
    // Predicated region
    $region58: #{tpu_custom_call.1} parent=1 // pred_check
      _
    $region59: #{tpu_custom_call.1} parent=1 // pred_check_branch
      %2555 = sbr.rel (0) target = $region61
    $region60: #{tpu_custom_call.1} parent=1 // pred_region
      _
    $region61: #{tpu_custom_call.1} parent=1 // pred_fallthru
      _
    %2556 = vsyncpa [#allocation4], 1
    %2557 = vsyncpa [#allocation6], 1
    %2558 = vsyncpa [#allocation9], 1
    %2559 = vsyncpa [#allocation12], 1

</llo_original>
